<compile_context>
chip_gen: v7x
topology: tpu7x:2x2x1
jax: 0.10.0
libtpu: 0.0.40
codegen_flags: <defaults>
</compile_context>

<pallas_src>
import functools
import math

import jax
import jax.numpy as jnp
from jax import lax
from jax.experimental import pallas as pl
from jax.experimental.pallas import tpu as pltpu


def _round_up(x, m):
    return (x + m - 1) // m * m


# ----------------------------- Pallas kernel --------------------------------
def rnn_fc_kernel(xproj_ref, wtop_ref, whh1_ref, b1_ref, fcw_ref, fcb_ref,
                  out_ref):
    """Wavefront 2-layer tanh RNN recurrence + final Linear for one batch block.

    xproj_ref: (T, Bblk, Hp) bf16   pre-projected layer-0 input (x @ wih0 + b0)
    wtop_ref : (Hp, 2*Hp)    bf16   [whh0 | wih1] stacked along columns
    whh1_ref : (Hp, Hp)      bf16
    b1_ref   : (1, Hp)       f32    (b_ih1 + b_hh1)
    fcw_ref  : (Hp, Cp)      bf16
    fcb_ref  : (1, Cp)       f32
    out_ref  : (Bblk, Cp)    f32
    """
    T, B, H = xproj_ref.shape

    wtop = wtop_ref[...]
    whh1 = whh1_ref[...]
    # Hoisted bias broadcast (JAX does not CSE broadcast_in_dim inside loops).
    b1b = jnp.broadcast_to(b1_ref[...], (B, H))

    # Carry: (p0_t = h0_{t-1} @ whh0 [f32], h1_{t-1} [bf16]); h_{-1} == 0.
    p0_init = jnp.zeros((B, H), jnp.float32)
    h1_init = jnp.zeros((B, H), jnp.bfloat16)

    def step(t, carry):
        p0, h1b = carry
        # Layer 0 activation for step t; its matmul was done last step.
        h0 = jnp.tanh(xproj_ref[t].astype(jnp.float32) + p0)
        h0b = h0.astype(jnp.bfloat16)
        # Critical-chain matmul (wavefront): [h0@whh0 | h0@wih1], K=H, N=2H.
        z = jnp.dot(h0b, wtop, preferred_element_type=jnp.float32)
        # Off-chain layer-1 hidden contribution (only needs h1_{t-1}).
        r1 = jnp.dot(h1b, whh1, preferred_element_type=jnp.float32)
        h1 = jnp.tanh(z[:, H:] + r1 + b1b)
        return z[:, :H], h1.astype(jnp.bfloat16)

    _, h1b_last = lax.fori_loop(0, T, step, (p0_init, h1_init),
                                unroll=min(T, 8))

    # Final classifier: lane-dense Cp-wide unmasked store.
    out_ref[...] = (
        jnp.dot(h1b_last, fcw_ref[...], preferred_element_type=jnp.float32)
        + fcb_ref[...]).astype(out_ref.dtype)


# ------------------------------ JAX wrapper ----------------------------------
@functools.partial(jax.jit, static_argnames=("num_classes",))
def rnn_text_classifier_forward(x_tokens, params, *, num_classes):
    """x_tokens: (B, T) int32 token ids -> (B, num_classes) f32 logits."""
    emb_w = params["embedding"]                       # (V, E)
    B, T = x_tokens.shape
    E = emb_w.shape[1]
    H = params["whh0"].shape[0]
    C = num_classes

    LANE = 128
    SUB = 16          # 16-sublane alignment (bf16 xproj tiles pack 2 rows/sublane)
    H_pad = _round_up(H, LANE)
    C_pad = _round_up(C, LANE)

    # Batch block: >= 2 "parallel" grid steps for medium/large batches (keeps
    # both v7x TensorCores busy); <= 128 rows to bound vreg pressure.  v6e
    # (128 MiB VMEM, 1 TC) could sweep larger blocks.
    B16 = _round_up(B, SUB)
    if B16 <= 2 * SUB:
        B_blk = B16                                    # too small to split
    else:
        B_blk = min(128, _round_up((B16 + 1) // 2, SUB))
    B_pad = _round_up(B16, B_blk)

    def pad2(w, rows, cols):
        return jnp.pad(w, ((0, rows - w.shape[0]), (0, cols - w.shape[1])))

    # Pre-projected embedding table: Embedding-then-Linear commutes with the
    # gather, so do (V,E)@(E,Hp)+b0 once here (XLA) and gather rows directly
    # in time-major order (no (B,T,E) relayout, no in-kernel input projection).
    wih0_p = pad2(params["wih0"], E, H_pad)
    b0_p = pad2(params["b0"], 1, H_pad)
    proj_tbl = (jnp.dot(emb_w, wih0_p, preferred_element_type=jnp.float32)
                + b0_p).astype(jnp.bfloat16)           # (V, Hp)
    xproj = jnp.take(proj_tbl, x_tokens.T, axis=0)     # (T, B, Hp) time-major
    xproj = jnp.pad(xproj, ((0, 0), (0, B_pad - B), (0, 0)))

    # Zero-padded bf16 matmul operands; f32 biases.  Zero padding keeps the
    # extra hidden/class columns exactly 0 through tanh, so real outputs are
    # unaffected.
    wtop = jnp.concatenate([pad2(params["whh0"], H_pad, H_pad),
                            pad2(params["wih1"], H_pad, H_pad)],
                           axis=1).astype(jnp.bfloat16)        # (Hp, 2*Hp)
    whh1 = pad2(params["whh1"], H_pad, H_pad).astype(jnp.bfloat16)
    b1 = pad2(params["b1"], 1, H_pad)
    fcw = pad2(params["fc_w"], H_pad, C_pad).astype(jnp.bfloat16)
    fcb = pad2(params["fc_b"], 1, C_pad)

    def full_spec(shape):
        return pl.BlockSpec(shape, lambda b: (0,) * len(shape))

    # Explicit VMEM budget: double-buffered blocks + headroom (weights have
    # constant index maps so they are not re-DMA'd per grid step, but still
    # budget two buffers each).
    def nbytes(shape, dt):
        return math.prod(shape) * jnp.dtype(dt).itemsize

    blk_bytes = (nbytes((T, B_blk, H_pad), jnp.bfloat16)
                 + nbytes((H_pad, 2 * H_pad), jnp.bfloat16)
                 + nbytes((H_pad, H_pad), jnp.bfloat16)
                 + nbytes((1, H_pad), jnp.float32)
                 + nbytes((H_pad, C_pad), jnp.bfloat16)
                 + nbytes((1, C_pad), jnp.float32)
                 + nbytes((B_blk, C_pad), jnp.float32))
    vmem_limit = int(min(128 << 20, max(32 << 20, 2 * blk_bytes + (8 << 20))))

    out = pl.pallas_call(
        rnn_fc_kernel,
        out_shape=jax.ShapeDtypeStruct((B_pad, C_pad), jnp.float32),
        grid=(B_pad // B_blk,),
        in_specs=[
            pl.BlockSpec((T, B_blk, H_pad), lambda b: (0, b, 0)),  # xproj
            full_spec((H_pad, 2 * H_pad)),                         # [whh0|wih1]
            full_spec((H_pad, H_pad)),                             # whh1
            full_spec((1, H_pad)),                                 # b1
            full_spec((H_pad, C_pad)),                             # fc_w
            full_spec((1, C_pad)),                                 # fc_b
        ],
        out_specs=pl.BlockSpec((B_blk, C_pad), lambda b: (b, 0)),
        compiler_params=pltpu.CompilerParams(
            dimension_semantics=("parallel",),
            vmem_limit_bytes=vmem_limit),
    )(xproj, wtop, whh1, b1, fcw, fcb)

    return out[:B, :C]


# --------------------------- parameter construction --------------------------
def init_params(key, vocab, emb_dim, hidden, num_classes):
    ks = jax.random.split(key, 12)
    s_rnn = 1.0 / jnp.sqrt(hidden)
    s_fc = 1.0 / jnp.sqrt(hidden)

    def unif(k, shape, scale):
        return jax.random.uniform(k, shape, jnp.float32, -scale, scale)

    # PyTorch: W_ih (H, in), W_hh (H, H); stored transposed (in, H) / (H, H).
    # Biases b_ih + b_hh are pre-summed (mathematically identical).
    return {
        "embedding": jax.random.normal(ks[0], (vocab, emb_dim), jnp.float32),
        "wih0": unif(ks[1], (emb_dim, hidden), s_rnn),
        "whh0": unif(ks[2], (hidden, hidden), s_rnn),
        "b0": (unif(ks[3], (1, hidden), s_rnn) + unif(ks[4], (1, hidden), s_rnn)),
        "wih1": unif(ks[5], (hidden, hidden), s_rnn),
        "whh1": unif(ks[6], (hidden, hidden), s_rnn),
        "b1": (unif(ks[7], (1, hidden), s_rnn) + unif(ks[8], (1, hidden), s_rnn)),
        "fc_w": unif(ks[9], (hidden, num_classes), s_fc),
        "fc_b": unif(ks[10], (1, num_classes), s_fc),
    }


# ------------------------------- references ----------------------------------
def reference_forward_f32(x_tokens, params):
    """Faithful f32 reference (PyTorch forward semantics)."""
    emb = jnp.take(params["embedding"], x_tokens, axis=0)   # (B, T, E)
    B, T, _ = emb.shape
    H = params["whh0"].shape[0]
    dot = functools.partial(jnp.dot, preferred_element_type=jnp.float32)
    h0 = jnp.zeros((B, H), jnp.float32)
    h1 = jnp.zeros((B, H), jnp.float32)
    for t in range(T):
        x_t = emb[:, t, :]
        h0 = jnp.tanh(dot(x_t, params["wih0"]) + dot(h0, params["whh0"])
                      + params["b0"])
        h1 = jnp.tanh(dot(h0, params["wih1"]) + dot(h1, params["whh1"])
                      + params["b1"])
    return dot(h1, params["fc_w"]) + params["fc_b"]


def reference_forward_bf16(x_tokens, params):
    """Plain-JAX reference mirroring the kernel's bf16 operand rounding."""
    bf = jnp.bfloat16
    dot = functools.partial(jnp.dot, preferred_element_type=jnp.float32)
    proj = (jnp.dot(params["embedding"], params["wih0"],
                    preferred_element_type=jnp.float32)
            + params["b0"]).astype(bf)
    xproj = jnp.take(proj, x_tokens, axis=0)                 # (B, T, H)
    B, T, H = xproj.shape
    h0 = jnp.zeros((B, H), jnp.float32)
    h1 = jnp.zeros((B, H), jnp.float32)
    for t in range(T):
        h0 = jnp.tanh(xproj[:, t].astype(jnp.float32)
                      + dot(h0.astype(bf), params["whh0"].astype(bf)))
        h1 = jnp.tanh(dot(h0.astype(bf), params["wih1"].astype(bf))
                      + dot(h1.astype(bf), params["whh1"].astype(bf))
                      + params["b1"])
    return dot(h1.astype(bf), params["fc_w"].astype(bf)) + params["fc_b"]


# --------------------------------- main ---------------------------------------
if __name__ == "__main__":
    NUM_CLASSES = 4
    VOCAB = 50          # emb_input_dim
    EMB_DIM = 32        # emb_output_dim
    HIDDEN = 32         # hidden_size
    NUM_LAYERS = 2      # kernel specialized to 2 layers
    BATCH = 2
    SEQ = 8

    key = jax.random.PRNGKey(0)
    k_tok, k_par = jax.random.split(key)

    x_tokens = jax.random.randint(k_tok, (BATCH, SEQ), 0, VOCAB, dtype=jnp.int32)
    params = init_params(k_par, VOCAB, EMB_DIM, HIDDEN, NUM_CLASSES)

    y = rnn_text_classifier_forward(x_tokens, params, num_classes=NUM_CLASSES)
    y = jax.block_until_ready(y)

    y_mirror = reference_forward_bf16(x_tokens, params)
    y_f32 = reference_forward_f32(x_tokens, params)

    assert y.shape == (BATCH, NUM_CLASSES)
    # Tight check vs. a JAX reference using the same bf16 operand rounding.
    assert jnp.allclose(y, y_mirror, atol=1e-2, rtol=1e-2)
    # Looser sanity check vs. the full-f32 (PyTorch-semantics) reference.
    assert jnp.allclose(y, y_f32, atol=5e-2, rtol=5e-2)

    print("KERNEL_OK")
</pallas_src>

<mosaic_0001>
module attributes {stable_mosaic.version = 11 : i64} {
  func.func @rnn_fc_kernel(%arg0: i32, %arg1: memref<8x16x128xbf16, #tpu.memory_space<vmem>>, %arg2: memref<128x256xbf16, #tpu.memory_space<vmem>>, %arg3: memref<128x128xbf16, #tpu.memory_space<vmem>>, %arg4: memref<1x128xf32, #tpu.memory_space<vmem>>, %arg5: memref<128x128xbf16, #tpu.memory_space<vmem>>, %arg6: memref<1x128xf32, #tpu.memory_space<vmem>>, %arg7: memref<16x128xf32, #tpu.memory_space<vmem>>) attributes {dimension_semantics = [#tpu.dimension_semantics<parallel>], iteration_bounds = array<i64: 1>, scalar_prefetch = 0 : i64, scratch_operands = 0 : i64, tpu.core_type = #tpu.core_type<tc>, window_params = [{transform_indices = @transform_0, window_bounds = array<i64: 8, 16, 128>}, {pipeline_mode = #tpu.pipeline_mode<synchronous>, transform_indices = @transform_1, window_bounds = array<i64: 128, 256>}, {pipeline_mode = #tpu.pipeline_mode<synchronous>, transform_indices = @transform_2, window_bounds = array<i64: 128, 128>}, {pipeline_mode = #tpu.pipeline_mode<synchronous>, transform_indices = @transform_3, window_bounds = array<i64: 1, 128>}, {pipeline_mode = #tpu.pipeline_mode<synchronous>, transform_indices = @transform_4, window_bounds = array<i64: 128, 128>}, {pipeline_mode = #tpu.pipeline_mode<synchronous>, transform_indices = @transform_5, window_bounds = array<i64: 1, 128>}, {transform_indices = @transform_6, window_bounds = array<i64: 16, 128>}]} {
    %c0 = arith.constant 0 : index
    %c0_0 = arith.constant 0 : index
    %0 = vector.load %arg2[%c0, %c0_0] : memref<128x256xbf16, #tpu.memory_space<vmem>>, vector<128x256xbf16>
    %c0_1 = arith.constant 0 : index
    %c0_2 = arith.constant 0 : index
    %1 = vector.load %arg3[%c0_1, %c0_2] : memref<128x128xbf16, #tpu.memory_space<vmem>>, vector<128x128xbf16>
    %c0_3 = arith.constant 0 : index
    %c0_4 = arith.constant 0 : index
    %2 = vector.load %arg4[%c0_3, %c0_4] : memref<1x128xf32, #tpu.memory_space<vmem>>, vector<1x128xf32>
    %3 = vector.shape_cast %2 : vector<1x128xf32> to vector<1x128xf32>
    %4 = vector.broadcast %3 : vector<1x128xf32> to vector<16x128xf32>
    %cst = arith.constant 0.000000e+00 : f32
    %5 = vector.broadcast %cst : f32 to vector<16x128xf32>
    %cst_5 = arith.constant 0.000000e+00 : bf16
    %6 = vector.broadcast %cst_5 : bf16 to vector<16x128xbf16>
    %c0_i32 = arith.constant 0 : i32
    %7 = arith.index_cast %c0_i32 : i32 to index
    %c0_6 = arith.constant 0 : index
    %c0_7 = arith.constant 0 : index
    %8 = vector.load %arg1[%7, %c0_6, %c0_7] : memref<8x16x128xbf16, #tpu.memory_space<vmem>>, vector<1x16x128xbf16>
    %9 = vector.shape_cast %8 : vector<1x16x128xbf16> to vector<16x128xbf16>
    %10 = arith.extf %9 : vector<16x128xbf16> to vector<16x128xf32>
    %11 = arith.addf %10, %5 : vector<16x128xf32>
    %12 = math.tanh %11 : vector<16x128xf32>
    %13 = arith.truncf %12 : vector<16x128xf32> to vector<16x128xbf16>
    %cst_8 = arith.constant dense<0.000000e+00> : vector<16x256xf32>
    %14 = tpu.matmul %13, %0, %cst_8 {dimension_numbers = #tpu.dot_dimension_numbers<[1], [0], [0], [1], [0, 0, 1, 1], [], []>} : vector<16x128xbf16>, vector<128x256xbf16>, vector<16x256xf32> -> vector<16x256xf32>
    %cst_9 = arith.constant dense<0.000000e+00> : vector<16x128xf32>
    %15 = tpu.matmul %6, %1, %cst_9 {dimension_numbers = #tpu.dot_dimension_numbers<[1], [0], [0], [1], [0, 0, 1, 1], [], []>} : vector<16x128xbf16>, vector<128x128xbf16>, vector<16x128xf32> -> vector<16x128xf32>
    %16 = vector.extract_strided_slice %14 {offsets = [0, 128], sizes = [16, 128], strides = [1, 1]} : vector<16x256xf32> to vector<16x128xf32>
    %17 = arith.addf %16, %15 : vector<16x128xf32>
    %18 = arith.addf %17, %4 : vector<16x128xf32>
    %19 = math.tanh %18 : vector<16x128xf32>
    %20 = vector.extract_strided_slice %14 {offsets = [0, 0], sizes = [16, 128], strides = [1, 1]} : vector<16x256xf32> to vector<16x128xf32>
    %21 = arith.truncf %19 : vector<16x128xf32> to vector<16x128xbf16>
    %c1_i32 = arith.constant 1 : i32
    %22 = arith.index_cast %c1_i32 : i32 to index
    %c0_10 = arith.constant 0 : index
    %c0_11 = arith.constant 0 : index
    %23 = vector.load %arg1[%22, %c0_10, %c0_11] : memref<8x16x128xbf16, #tpu.memory_space<vmem>>, vector<1x16x128xbf16>
    %24 = vector.shape_cast %23 : vector<1x16x128xbf16> to vector<16x128xbf16>
    %25 = arith.extf %24 : vector<16x128xbf16> to vector<16x128xf32>
    %26 = arith.addf %25, %20 : vector<16x128xf32>
    %27 = math.tanh %26 : vector<16x128xf32>
    %28 = arith.truncf %27 : vector<16x128xf32> to vector<16x128xbf16>
    %cst_12 = arith.constant dense<0.000000e+00> : vector<16x256xf32>
    %29 = tpu.matmul %28, %0, %cst_12 {dimension_numbers = #tpu.dot_dimension_numbers<[1], [0], [0], [1], [0, 0, 1, 1], [], []>} : vector<16x128xbf16>, vector<128x256xbf16>, vector<16x256xf32> -> vector<16x256xf32>
    %cst_13 = arith.constant dense<0.000000e+00> : vector<16x128xf32>
    %30 = tpu.matmul %21, %1, %cst_13 {dimension_numbers = #tpu.dot_dimension_numbers<[1], [0], [0], [1], [0, 0, 1, 1], [], []>} : vector<16x128xbf16>, vector<128x128xbf16>, vector<16x128xf32> -> vector<16x128xf32>
    %31 = vector.extract_strided_slice %29 {offsets = [0, 128], sizes = [16, 128], strides = [1, 1]} : vector<16x256xf32> to vector<16x128xf32>
    %32 = arith.addf %31, %30 : vector<16x128xf32>
    %33 = arith.addf %32, %4 : vector<16x128xf32>
    %34 = math.tanh %33 : vector<16x128xf32>
    %35 = vector.extract_strided_slice %29 {offsets = [0, 0], sizes = [16, 128], strides = [1, 1]} : vector<16x256xf32> to vector<16x128xf32>
    %36 = arith.truncf %34 : vector<16x128xf32> to vector<16x128xbf16>
    %c2_i32 = arith.constant 2 : i32
    %37 = arith.index_cast %c2_i32 : i32 to index
    %c0_14 = arith.constant 0 : index
    %c0_15 = arith.constant 0 : index
    %38 = vector.load %arg1[%37, %c0_14, %c0_15] : memref<8x16x128xbf16, #tpu.memory_space<vmem>>, vector<1x16x128xbf16>
    %39 = vector.shape_cast %38 : vector<1x16x128xbf16> to vector<16x128xbf16>
    %40 = arith.extf %39 : vector<16x128xbf16> to vector<16x128xf32>
    %41 = arith.addf %40, %35 : vector<16x128xf32>
    %42 = math.tanh %41 : vector<16x128xf32>
    %43 = arith.truncf %42 : vector<16x128xf32> to vector<16x128xbf16>
    %cst_16 = arith.constant dense<0.000000e+00> : vector<16x256xf32>
    %44 = tpu.matmul %43, %0, %cst_16 {dimension_numbers = #tpu.dot_dimension_numbers<[1], [0], [0], [1], [0, 0, 1, 1], [], []>} : vector<16x128xbf16>, vector<128x256xbf16>, vector<16x256xf32> -> vector<16x256xf32>
    %cst_17 = arith.constant dense<0.000000e+00> : vector<16x128xf32>
    %45 = tpu.matmul %36, %1, %cst_17 {dimension_numbers = #tpu.dot_dimension_numbers<[1], [0], [0], [1], [0, 0, 1, 1], [], []>} : vector<16x128xbf16>, vector<128x128xbf16>, vector<16x128xf32> -> vector<16x128xf32>
    %46 = vector.extract_strided_slice %44 {offsets = [0, 128], sizes = [16, 128], strides = [1, 1]} : vector<16x256xf32> to vector<16x128xf32>
    %47 = arith.addf %46, %45 : vector<16x128xf32>
    %48 = arith.addf %47, %4 : vector<16x128xf32>
    %49 = math.tanh %48 : vector<16x128xf32>
    %50 = vector.extract_strided_slice %44 {offsets = [0, 0], sizes = [16, 128], strides = [1, 1]} : vector<16x256xf32> to vector<16x128xf32>
    %51 = arith.truncf %49 : vector<16x128xf32> to vector<16x128xbf16>
    %c3_i32 = arith.constant 3 : i32
    %52 = arith.index_cast %c3_i32 : i32 to index
    %c0_18 = arith.constant 0 : index
    %c0_19 = arith.constant 0 : index
    %53 = vector.load %arg1[%52, %c0_18, %c0_19] : memref<8x16x128xbf16, #tpu.memory_space<vmem>>, vector<1x16x128xbf16>
    %54 = vector.shape_cast %53 : vector<1x16x128xbf16> to vector<16x128xbf16>
    %55 = arith.extf %54 : vector<16x128xbf16> to vector<16x128xf32>
    %56 = arith.addf %55, %50 : vector<16x128xf32>
    %57 = math.tanh %56 : vector<16x128xf32>
    %58 = arith.truncf %57 : vector<16x128xf32> to vector<16x128xbf16>
    %cst_20 = arith.constant dense<0.000000e+00> : vector<16x256xf32>
    %59 = tpu.matmul %58, %0, %cst_20 {dimension_numbers = #tpu.dot_dimension_numbers<[1], [0], [0], [1], [0, 0, 1, 1], [], []>} : vector<16x128xbf16>, vector<128x256xbf16>, vector<16x256xf32> -> vector<16x256xf32>
    %cst_21 = arith.constant dense<0.000000e+00> : vector<16x128xf32>
    %60 = tpu.matmul %51, %1, %cst_21 {dimension_numbers = #tpu.dot_dimension_numbers<[1], [0], [0], [1], [0, 0, 1, 1], [], []>} : vector<16x128xbf16>, vector<128x128xbf16>, vector<16x128xf32> -> vector<16x128xf32>
    %61 = vector.extract_strided_slice %59 {offsets = [0, 128], sizes = [16, 128], strides = [1, 1]} : vector<16x256xf32> to vector<16x128xf32>
    %62 = arith.addf %61, %60 : vector<16x128xf32>
    %63 = arith.addf %62, %4 : vector<16x128xf32>
    %64 = math.tanh %63 : vector<16x128xf32>
    %65 = vector.extract_strided_slice %59 {offsets = [0, 0], sizes = [16, 128], strides = [1, 1]} : vector<16x256xf32> to vector<16x128xf32>
    %66 = arith.truncf %64 : vector<16x128xf32> to vector<16x128xbf16>
    %c4_i32 = arith.constant 4 : i32
    %67 = arith.index_cast %c4_i32 : i32 to index
    %c0_22 = arith.constant 0 : index
    %c0_23 = arith.constant 0 : index
    %68 = vector.load %arg1[%67, %c0_22, %c0_23] : memref<8x16x128xbf16, #tpu.memory_space<vmem>>, vector<1x16x128xbf16>
    %69 = vector.shape_cast %68 : vector<1x16x128xbf16> to vector<16x128xbf16>
    %70 = arith.extf %69 : vector<16x128xbf16> to vector<16x128xf32>
    %71 = arith.addf %70, %65 : vector<16x128xf32>
    %72 = math.tanh %71 : vector<16x128xf32>
    %73 = arith.truncf %72 : vector<16x128xf32> to vector<16x128xbf16>
    %cst_24 = arith.constant dense<0.000000e+00> : vector<16x256xf32>
    %74 = tpu.matmul %73, %0, %cst_24 {dimension_numbers = #tpu.dot_dimension_numbers<[1], [0], [0], [1], [0, 0, 1, 1], [], []>} : vector<16x128xbf16>, vector<128x256xbf16>, vector<16x256xf32> -> vector<16x256xf32>
    %cst_25 = arith.constant dense<0.000000e+00> : vector<16x128xf32>
    %75 = tpu.matmul %66, %1, %cst_25 {dimension_numbers = #tpu.dot_dimension_numbers<[1], [0], [0], [1], [0, 0, 1, 1], [], []>} : vector<16x128xbf16>, vector<128x128xbf16>, vector<16x128xf32> -> vector<16x128xf32>
    %76 = vector.extract_strided_slice %74 {offsets = [0, 128], sizes = [16, 128], strides = [1, 1]} : vector<16x256xf32> to vector<16x128xf32>
    %77 = arith.addf %76, %75 : vector<16x128xf32>
    %78 = arith.addf %77, %4 : vector<16x128xf32>
    %79 = math.tanh %78 : vector<16x128xf32>
    %80 = vector.extract_strided_slice %74 {offsets = [0, 0], sizes = [16, 128], strides = [1, 1]} : vector<16x256xf32> to vector<16x128xf32>
    %81 = arith.truncf %79 : vector<16x128xf32> to vector<16x128xbf16>
    %c5_i32 = arith.constant 5 : i32
    %82 = arith.index_cast %c5_i32 : i32 to index
    %c0_26 = arith.constant 0 : index
    %c0_27 = arith.constant 0 : index
    %83 = vector.load %arg1[%82, %c0_26, %c0_27] : memref<8x16x128xbf16, #tpu.memory_space<vmem>>, vector<1x16x128xbf16>
    %84 = vector.shape_cast %83 : vector<1x16x128xbf16> to vector<16x128xbf16>
    %85 = arith.extf %84 : vector<16x128xbf16> to vector<16x128xf32>
    %86 = arith.addf %85, %80 : vector<16x128xf32>
    %87 = math.tanh %86 : vector<16x128xf32>
    %88 = arith.truncf %87 : vector<16x128xf32> to vector<16x128xbf16>
    %cst_28 = arith.constant dense<0.000000e+00> : vector<16x256xf32>
    %89 = tpu.matmul %88, %0, %cst_28 {dimension_numbers = #tpu.dot_dimension_numbers<[1], [0], [0], [1], [0, 0, 1, 1], [], []>} : vector<16x128xbf16>, vector<128x256xbf16>, vector<16x256xf32> -> vector<16x256xf32>
    %cst_29 = arith.constant dense<0.000000e+00> : vector<16x128xf32>
    %90 = tpu.matmul %81, %1, %cst_29 {dimension_numbers = #tpu.dot_dimension_numbers<[1], [0], [0], [1], [0, 0, 1, 1], [], []>} : vector<16x128xbf16>, vector<128x128xbf16>, vector<16x128xf32> -> vector<16x128xf32>
    %91 = vector.extract_strided_slice %89 {offsets = [0, 128], sizes = [16, 128], strides = [1, 1]} : vector<16x256xf32> to vector<16x128xf32>
    %92 = arith.addf %91, %90 : vector<16x128xf32>
    %93 = arith.addf %92, %4 : vector<16x128xf32>
    %94 = math.tanh %93 : vector<16x128xf32>
    %95 = vector.extract_strided_slice %89 {offsets = [0, 0], sizes = [16, 128], strides = [1, 1]} : vector<16x256xf32> to vector<16x128xf32>
    %96 = arith.truncf %94 : vector<16x128xf32> to vector<16x128xbf16>
    %c6_i32 = arith.constant 6 : i32
    %97 = arith.index_cast %c6_i32 : i32 to index
    %c0_30 = arith.constant 0 : index
    %c0_31 = arith.constant 0 : index
    %98 = vector.load %arg1[%97, %c0_30, %c0_31] : memref<8x16x128xbf16, #tpu.memory_space<vmem>>, vector<1x16x128xbf16>
    %99 = vector.shape_cast %98 : vector<1x16x128xbf16> to vector<16x128xbf16>
    %100 = arith.extf %99 : vector<16x128xbf16> to vector<16x128xf32>
    %101 = arith.addf %100, %95 : vector<16x128xf32>
    %102 = math.tanh %101 : vector<16x128xf32>
    %103 = arith.truncf %102 : vector<16x128xf32> to vector<16x128xbf16>
    %cst_32 = arith.constant dense<0.000000e+00> : vector<16x256xf32>
    %104 = tpu.matmul %103, %0, %cst_32 {dimension_numbers = #tpu.dot_dimension_numbers<[1], [0], [0], [1], [0, 0, 1, 1], [], []>} : vector<16x128xbf16>, vector<128x256xbf16>, vector<16x256xf32> -> vector<16x256xf32>
    %cst_33 = arith.constant dense<0.000000e+00> : vector<16x128xf32>
    %105 = tpu.matmul %96, %1, %cst_33 {dimension_numbers = #tpu.dot_dimension_numbers<[1], [0], [0], [1], [0, 0, 1, 1], [], []>} : vector<16x128xbf16>, vector<128x128xbf16>, vector<16x128xf32> -> vector<16x128xf32>
    %106 = vector.extract_strided_slice %104 {offsets = [0, 128], sizes = [16, 128], strides = [1, 1]} : vector<16x256xf32> to vector<16x128xf32>
    %107 = arith.addf %106, %105 : vector<16x128xf32>
    %108 = arith.addf %107, %4 : vector<16x128xf32>
    %109 = math.tanh %108 : vector<16x128xf32>
    %110 = vector.extract_strided_slice %104 {offsets = [0, 0], sizes = [16, 128], strides = [1, 1]} : vector<16x256xf32> to vector<16x128xf32>
    %111 = arith.truncf %109 : vector<16x128xf32> to vector<16x128xbf16>
    %c7_i32 = arith.constant 7 : i32
    %112 = arith.index_cast %c7_i32 : i32 to index
    %c0_34 = arith.constant 0 : index
    %c0_35 = arith.constant 0 : index
    %113 = vector.load %arg1[%112, %c0_34, %c0_35] : memref<8x16x128xbf16, #tpu.memory_space<vmem>>, vector<1x16x128xbf16>
    %114 = vector.shape_cast %113 : vector<1x16x128xbf16> to vector<16x128xbf16>
    %115 = arith.extf %114 : vector<16x128xbf16> to vector<16x128xf32>
    %116 = arith.addf %115, %110 : vector<16x128xf32>
    %117 = math.tanh %116 : vector<16x128xf32>
    %118 = arith.truncf %117 : vector<16x128xf32> to vector<16x128xbf16>
    %cst_36 = arith.constant dense<0.000000e+00> : vector<16x256xf32>
    %119 = tpu.matmul %118, %0, %cst_36 {dimension_numbers = #tpu.dot_dimension_numbers<[1], [0], [0], [1], [0, 0, 1, 1], [], []>} : vector<16x128xbf16>, vector<128x256xbf16>, vector<16x256xf32> -> vector<16x256xf32>
    %cst_37 = arith.constant dense<0.000000e+00> : vector<16x128xf32>
    %120 = tpu.matmul %111, %1, %cst_37 {dimension_numbers = #tpu.dot_dimension_numbers<[1], [0], [0], [1], [0, 0, 1, 1], [], []>} : vector<16x128xbf16>, vector<128x128xbf16>, vector<16x128xf32> -> vector<16x128xf32>
    %121 = vector.extract_strided_slice %119 {offsets = [0, 128], sizes = [16, 128], strides = [1, 1]} : vector<16x256xf32> to vector<16x128xf32>
    %122 = arith.addf %121, %120 : vector<16x128xf32>
    %123 = arith.addf %122, %4 : vector<16x128xf32>
    %124 = math.tanh %123 : vector<16x128xf32>
    %125 = vector.extract_strided_slice %119 {offsets = [0, 0], sizes = [16, 128], strides = [1, 1]} : vector<16x256xf32> to vector<16x128xf32>
    %126 = arith.truncf %124 : vector<16x128xf32> to vector<16x128xbf16>
    %c8_i32 = arith.constant 8 : i32
    %c0_38 = arith.constant 0 : index
    %c0_39 = arith.constant 0 : index
    %127 = vector.load %arg5[%c0_38, %c0_39] : memref<128x128xbf16, #tpu.memory_space<vmem>>, vector<128x128xbf16>
    %cst_40 = arith.constant dense<0.000000e+00> : vector<16x128xf32>
    %128 = tpu.matmul %126, %127, %cst_40 {dimension_numbers = #tpu.dot_dimension_numbers<[1], [0], [0], [1], [0, 0, 1, 1], [], []>} : vector<16x128xbf16>, vector<128x128xbf16>, vector<16x128xf32> -> vector<16x128xf32>
    %c0_41 = arith.constant 0 : index
    %c0_42 = arith.constant 0 : index
    %129 = vector.load %arg6[%c0_41, %c0_42] : memref<1x128xf32, #tpu.memory_space<vmem>>, vector<1x128xf32>
    %130 = vector.broadcast %129 : vector<1x128xf32> to vector<16x128xf32>
    %131 = arith.addf %128, %130 : vector<16x128xf32>
    %c0_43 = arith.constant 0 : index
    %c0_44 = arith.constant 0 : index
    %132 = vector.load %arg7[%c0_43, %c0_44] : memref<16x128xf32, #tpu.memory_space<vmem>>, vector<16x128xf32>
    tpu.vector_store %arg7[%c0_43, %c0_44], %131 {strides = array<i32>} : memref<16x128xf32, #tpu.memory_space<vmem>>, vector<16x128xf32>,
    return
  }
  func.func @transform_0(%arg0: i32) -> (i32, i32, i32) {
    %c0_i32 = arith.constant 0 : i32
    %c0_i32_0 = arith.constant 0 : i32
    %c0_i32_1 = arith.constant 0 : i32
    return %c0_i32, %arg0, %c0_i32_0 : i32, i32, i32
  }
  func.func @transform_1(%arg0: i32) -> (i32, i32) {
    %c0_i32 = arith.constant 0 : i32
    %c0_i32_0 = arith.constant 0 : i32
    %c0_i32_1 = arith.constant 0 : i32
    return %c0_i32, %c0_i32_0 : i32, i32
  }
  func.func @transform_2(%arg0: i32) -> (i32, i32) {
    %c0_i32 = arith.constant 0 : i32
    %c0_i32_0 = arith.constant 0 : i32
    %c0_i32_1 = arith.constant 0 : i32
    return %c0_i32, %c0_i32_0 : i32, i32
  }
  func.func @transform_3(%arg0: i32) -> (i32, i32) {
    %c0_i32 = arith.constant 0 : i32
    %c0_i32_0 = arith.constant 0 : i32
    %c0_i32_1 = arith.constant 0 : i32
    return %c0_i32, %c0_i32_0 : i32, i32
  }
  func.func @transform_4(%arg0: i32) -> (i32, i32) {
    %c0_i32 = arith.constant 0 : i32
    %c0_i32_0 = arith.constant 0 : i32
    %c0_i32_1 = arith.constant 0 : i32
    return %c0_i32, %c0_i32_0 : i32, i32
  }
  func.func @transform_5(%arg0: i32) -> (i32, i32) {
    %c0_i32 = arith.constant 0 : i32
    %c0_i32_0 = arith.constant 0 : i32
    %c0_i32_1 = arith.constant 0 : i32
    return %c0_i32, %c0_i32_0 : i32, i32
  }
  func.func @transform_6(%arg0: i32) -> (i32, i32) {
    %c0_i32 = arith.constant 0 : i32
    %c0_i32_0 = arith.constant 0 : i32
    return %arg0, %c0_i32 : i32, i32
  }
}

</mosaic_0001>

<llo_original>
// kernel: rnn_text_classifier_forward.1
$region0: #{rnn_text_classifier_forward.1}
  #allocation0 [shape = 'u32[]', space=smem, size = 0x4, offset = 0x4, fixed_abs, tag = 'smem constant byte address 0x4 - core index']
  #allocation1 [shape = 'u32[144,128]{1,0:T(1,128)}', space=vmem, size = 0x12000, scoped, tag = 'internal scratch']
  %s0 = inlined_call_operand.vmem [shape: bf16[8,16,128], index: 0, kind: input, shape index: {}]
  %s1 = inlined_call_operand.vmem [shape: bf16[128,256], index: 1, kind: input, shape index: {}]
  %s2 = inlined_call_operand.vmem [shape: bf16[128,128], index: 2, kind: input, shape index: {}]
  %s3 = inlined_call_operand.vmem [shape: f32[1,128], index: 3, kind: input, shape index: {}]
  %s4 = inlined_call_operand.vmem [shape: bf16[128,128], index: 4, kind: input, shape index: {}]
  %s5 = inlined_call_operand.vmem [shape: f32[1,128], index: 5, kind: input, shape index: {}]
  %s6 = inlined_call_operand.vmem [shape: f32[16,128], index: 6, kind: output, shape index: {}]
  %s7 = sld [smem:[#allocation0]]
  $region34: #{rnn_text_classifier_forward.1} parent=0
    _
  %s9 = ssub.s32 1, %s7
  %s10 = scalar_select 0, %s9, %s7
  // Predicated region
  $region2: #{rnn_text_classifier_forward.1} parent=0 // pred_check
    _
  $region3: #{rnn_text_classifier_forward.1} parent=0 // pred_check_branch
    %12 = sbr.rel (0) target = $region5
  $region4: #{rnn_text_classifier_forward.1} parent=0 // pred_region
    _
  $region5: #{rnn_text_classifier_forward.1} parent=0 // pred_fallthru
    _
  // Predicated region
  $region6: #{rnn_text_classifier_forward.1} parent=0 // pred_check
    _
  $region7: #{rnn_text_classifier_forward.1} parent=0 // pred_check_branch
    %14 = sbr.rel (0) target = $region9
  $region8: #{rnn_text_classifier_forward.1} parent=0 // pred_region
    _
  $region9: #{rnn_text_classifier_forward.1} parent=0 // pred_fallthru
    _
  // Predicated region
  $region10: #{rnn_text_classifier_forward.1} parent=0 // pred_check
    _
  $region11: #{rnn_text_classifier_forward.1} parent=0 // pred_check_branch
    %16 = sbr.rel (0) target = $region13
  $region12: #{rnn_text_classifier_forward.1} parent=0 // pred_region
    _
  $region13: #{rnn_text_classifier_forward.1} parent=0 // pred_fallthru
    _
  // Predicated region
  $region14: #{rnn_text_classifier_forward.1} parent=0 // pred_check
    _
  $region15: #{rnn_text_classifier_forward.1} parent=0 // pred_check_branch
    %18 = sbr.rel (0) target = $region17
  $region16: #{rnn_text_classifier_forward.1} parent=0 // pred_region
    _
  $region17: #{rnn_text_classifier_forward.1} parent=0 // pred_fallthru
    _
  // Predicated region
  $region18: #{rnn_text_classifier_forward.1} parent=0 // pred_check
    _
  $region19: #{rnn_text_classifier_forward.1} parent=0 // pred_check_branch
    %20 = sbr.rel (0) target = $region21
  $region20: #{rnn_text_classifier_forward.1} parent=0 // pred_region
    _
  $region21: #{rnn_text_classifier_forward.1} parent=0 // pred_fallthru
    _
  // Predicated region
  $region22: #{rnn_text_classifier_forward.1} parent=0 // pred_check
    _
  $region23: #{rnn_text_classifier_forward.1} parent=0 // pred_check_branch
    %22 = sbr.rel (0) target = $region25
  $region24: #{rnn_text_classifier_forward.1} parent=0 // pred_region
    _
  $region25: #{rnn_text_classifier_forward.1} parent=0 // pred_fallthru
    _
  %v24 = vld [vmem:[%s1] sm:$0xff]
  %v25 = vld [vmem:[%s1 + $0x8] sm:$0xff]
  %v26 = vld [vmem:[%s1 + $0x10] sm:$0xff]
  %v27 = vld [vmem:[%s1 + $0x18] sm:$0xff]
  %v28 = vld [vmem:[%s1 + $0x20] sm:$0xff]
  %v29 = vld [vmem:[%s1 + $0x28] sm:$0xff]
  %v30 = vld [vmem:[%s1 + $0x30] sm:$0xff]
  %v31 = vld [vmem:[%s1 + $0x38] sm:$0xff]
  %v32 = vld [vmem:[%s1 + $0x40] sm:$0xff]
  %v33 = vld [vmem:[%s1 + $0x48] sm:$0xff]
  %v34 = vld [vmem:[%s1 + $0x50] sm:$0xff]
  %v35 = vld [vmem:[%s1 + $0x58] sm:$0xff]
  %v36 = vld [vmem:[%s1 + $0x60] sm:$0xff]
  %v37 = vld [vmem:[%s1 + $0x68] sm:$0xff]
  %v38 = vld [vmem:[%s1 + $0x70] sm:$0xff]
  %v39 = vld [vmem:[%s1 + $0x78] sm:$0xff]
  %v40 = vld [vmem:[%s2] sm:$0xf]
  %v41 = vld [vmem:[%s2 + $0x4] sm:$0xf]
  %v42 = vld [vmem:[%s2 + $0x8] sm:$0xf]
  %v43 = vld [vmem:[%s2 + $0xc] sm:$0xf]
  %v44 = vld [vmem:[%s2 + $0x10] sm:$0xf]
  %v45 = vld [vmem:[%s2 + $0x14] sm:$0xf]
  %v46 = vld [vmem:[%s2 + $0x18] sm:$0xf]
  %v47 = vld [vmem:[%s2 + $0x1c] sm:$0xf]
  %v48 = vld [vmem:[%s2 + $0x20] sm:$0xf]
  %v49 = vld [vmem:[%s2 + $0x24] sm:$0xf]
  %v50 = vld [vmem:[%s2 + $0x28] sm:$0xf]
  %v51 = vld [vmem:[%s2 + $0x2c] sm:$0xf]
  %v52 = vld [vmem:[%s2 + $0x30] sm:$0xf]
  %v53 = vld [vmem:[%s2 + $0x34] sm:$0xf]
  %v54 = vld [vmem:[%s2 + $0x38] sm:$0xf]
  %v55 = vld [vmem:[%s2 + $0x3c] sm:$0xf]
  %v56 = vld [vmem:[%s3] sm:$0x1]
  %v58 = vlaneseq
  %v59 = vshrl.u32 %v58, 7
  %v60 = vsub.s32 0, %v59
  %v61 = vrot.slane %v56, %v60
  %v63 = vld [vmem:[%s0] sm:$0xf]
  %v64 = vld [vmem:[%s0 + $0x4] sm:$0xf]
  %v65 = vunpack.c.l.bf16 %v63
  %v66 = vunpack.c.l.bf16 %v64
  %v67 = vadd.f32 %v65, 0.0
  %v68 = vadd.f32 %v66, 0.0
  %v69 = vtanh.pop %v67
  %v70 = vtanh.pop %v68
  %v71 = vpack.c.bf16 %v70, %v69
  %v88 = vunpack.c.l.b16 %v24
  %v89 = vunpack.c.h.b16 %v24
  %v90 = vunpack.c.l.b16 %v25
  %v91 = vunpack.c.h.b16 %v25
  %v92 = vunpack.c.l.b16 %v26
  %v93 = vunpack.c.h.b16 %v26
  %v94 = vunpack.c.l.b16 %v27
  %v95 = vunpack.c.h.b16 %v27
  %v96 = vunpack.c.l.b16 %v28
  %v97 = vunpack.c.h.b16 %v28
  %v98 = vunpack.c.l.b16 %v29
  %v99 = vunpack.c.h.b16 %v29
  %v100 = vunpack.c.l.b16 %v30
  %v101 = vunpack.c.h.b16 %v30
  %v102 = vunpack.c.l.b16 %v31
  %v103 = vunpack.c.h.b16 %v31
  %v104 = vunpack.c.l.b16 %v32
  %v105 = vunpack.c.h.b16 %v32
  %v106 = vunpack.c.l.b16 %v33
  %v107 = vunpack.c.h.b16 %v33
  %v108 = vunpack.c.l.b16 %v34
  %v109 = vunpack.c.h.b16 %v34
  %v110 = vunpack.c.l.b16 %v35
  %v111 = vunpack.c.h.b16 %v35
  %v112 = vunpack.c.l.b16 %v36
  %v113 = vunpack.c.h.b16 %v36
  %v114 = vunpack.c.l.b16 %v37
  %v115 = vunpack.c.h.b16 %v37
  %v116 = vunpack.c.l.b16 %v38
  %v117 = vunpack.c.h.b16 %v38
  %v118 = vunpack.c.l.b16 %v39
  %v119 = vunpack.c.h.b16 %v39
  %v120 = vpack.c.b16 %v90, %v88
  %v121 = vpack.c.b16 %v91, %v89
  %v122 = vpack.c.b16 %v94, %v92
  %v123 = vpack.c.b16 %v95, %v93
  %v124 = vpack.c.b16 %v98, %v96
  %v125 = vpack.c.b16 %v99, %v97
  %v126 = vpack.c.b16 %v102, %v100
  %v127 = vpack.c.b16 %v103, %v101
  %v128 = vpack.c.b16 %v106, %v104
  %v129 = vpack.c.b16 %v107, %v105
  %v130 = vpack.c.b16 %v110, %v108
  %v131 = vpack.c.b16 %v111, %v109
  %v132 = vpack.c.b16 %v114, %v112
  %v133 = vpack.c.b16 %v115, %v113
  %v134 = vpack.c.b16 %v118, %v116
  %v135 = vpack.c.b16 %v119, %v117
  %152 = vmatprep.subr.bf16.mxu0 %v121
  %153 = vmatpush1.bf16.msra.mxu0 %v120
  %154 = vmatprep.subr.bf16.mxu0 %v123
  %155 = vmatpush1.bf16.msra.mxu0 %v122
  %156 = vmatprep.subr.bf16.mxu0 %v125
  %157 = vmatpush1.bf16.msra.mxu0 %v124
  %158 = vmatprep.subr.bf16.mxu0 %v127
  %159 = vmatpush1.bf16.msra.mxu0 %v126
  %160 = vmatprep.subr.bf16.mxu0 %v129
  %161 = vmatpush1.bf16.msra.mxu0 %v128
  %162 = vmatprep.subr.bf16.mxu0 %v131
  %163 = vmatpush1.bf16.msra.mxu0 %v130
  %164 = vmatprep.subr.bf16.mxu0 %v133
  %165 = vmatpush1.bf16.msra.mxu0 %v132
  %166 = vmatprep.subr.bf16.mxu0 %v135
  %167 = vmatpush1.bf16.msra.mxu0 %v134
  %168 = vmatprep.subr.bf16.mxu0 0
  %169 = vmatpush1.bf16.msra.mxu0 0
  %170 = vmatprep.subr.bf16.mxu0 0
  %171 = vmatpush1.bf16.msra.mxu0 0
  %172 = vmatprep.subr.bf16.mxu0 0
  %173 = vmatpush1.bf16.msra.mxu0 0
  %174 = vmatprep.subr.bf16.mxu0 0
  %175 = vmatpush1.bf16.msra.mxu0 0
  %176 = vmatprep.subr.bf16.mxu0 0
  %177 = vmatpush1.bf16.msra.mxu0 0
  %178 = vmatprep.subr.bf16.mxu0 0
  %179 = vmatpush1.bf16.msra.mxu0 0
  %180 = vmatprep.subr.bf16.mxu0 0
  %181 = vmatpush1.bf16.msra.mxu0 0
  %182 = vmatprep.subr.bf16.mxu0 0
  %183 = vmatpush1.bf16.msra.mxu0 0
  %184 = vmatprep.mubr.bf16.mxu0 0
  %185 = vmatmul.mubr.bf16.gmra.mrb[0].mxu0 %v71
  %v186 = vpop.f32.mrb[0].mxu0
  %v187 = vadd.f32 0.0, %v186
  %v188 = vpop.f32.mrb[0].mxu0
  %v189 = vadd.f32 0.0, %v188
  %v190 = vpop.f32.mrb[0].mxu0
  %v191 = vadd.f32 0.0, %v190
  %v192 = vpop.f32.mrb[0].mxu0
  %v193 = vadd.f32 0.0, %v192
  %194 = vdwg.mxu0
  %v211 = vunpack.c.l.b16 %v40
  %v212 = vunpack.c.l.b16 %v41
  %v213 = vunpack.c.l.b16 %v42
  %v214 = vunpack.c.l.b16 %v43
  %v215 = vunpack.c.l.b16 %v44
  %v216 = vunpack.c.l.b16 %v45
  %v217 = vunpack.c.l.b16 %v46
  %v218 = vunpack.c.l.b16 %v47
  %v219 = vunpack.c.l.b16 %v48
  %v220 = vunpack.c.l.b16 %v49
  %v221 = vunpack.c.l.b16 %v50
  %v222 = vunpack.c.l.b16 %v51
  %v223 = vunpack.c.l.b16 %v52
  %v224 = vunpack.c.l.b16 %v53
  %v225 = vunpack.c.l.b16 %v54
  %v226 = vunpack.c.l.b16 %v55
  %v227 = vpack.c.b16 %v212, %v211
  %v228 = vpack.c.b16 %v214, %v213
  %v229 = vpack.c.b16 %v216, %v215
  %v230 = vpack.c.b16 %v218, %v217
  %v231 = vpack.c.b16 %v220, %v219
  %v232 = vpack.c.b16 %v222, %v221
  %v233 = vpack.c.b16 %v224, %v223
  %v234 = vpack.c.b16 %v226, %v225
  %243 = vmatprep.subr.bf16.mxu0 0
  %244 = vmatpush1.bf16.msra.mxu0 %v227
  %245 = vmatprep.subr.bf16.mxu0 0
  %246 = vmatpush1.bf16.msra.mxu0 %v228
  %247 = vmatprep.subr.bf16.mxu0 0
  %248 = vmatpush1.bf16.msra.mxu0 %v229
  %249 = vmatprep.subr.bf16.mxu0 0
  %250 = vmatpush1.bf16.msra.mxu0 %v230
  %251 = vmatprep.subr.bf16.mxu0 0
  %252 = vmatpush1.bf16.msra.mxu0 %v231
  %253 = vmatprep.subr.bf16.mxu0 0
  %254 = vmatpush1.bf16.msra.mxu0 %v232
  %255 = vmatprep.subr.bf16.mxu0 0
  %256 = vmatpush1.bf16.msra.mxu0 %v233
  %257 = vmatprep.subr.bf16.mxu0 0
  %258 = vmatpush1.bf16.msra.mxu0 %v234
  %259 = vmatprep.subr.bf16.mxu0 0
  %260 = vmatpush1.bf16.msra.mxu0 0
  %261 = vmatprep.subr.bf16.mxu0 0
  %262 = vmatpush1.bf16.msra.mxu0 0
  %263 = vmatprep.subr.bf16.mxu0 0
  %264 = vmatpush1.bf16.msra.mxu0 0
  %265 = vmatprep.subr.bf16.mxu0 0
  %266 = vmatpush1.bf16.msra.mxu0 0
  %267 = vmatprep.subr.bf16.mxu0 0
  %268 = vmatpush1.bf16.msra.mxu0 0
  %269 = vmatprep.subr.bf16.mxu0 0
  %270 = vmatpush1.bf16.msra.mxu0 0
  %271 = vmatprep.subr.bf16.mxu0 0
  %272 = vmatpush1.bf16.msra.mxu0 0
  %273 = vmatprep.subr.bf16.mxu0 0
  %274 = vmatpush1.bf16.msra.mxu0 0
  %275 = vmatprep.mubr.bf16.mxu0 0
  %276 = vmatmul.mubr.bf16.gmra.mrb[0].mxu0 0
  %v277 = vpop.f32.mrb[0].mxu0
  %v278 = vadd.f32 0.0, %v277
  %v279 = vpop.f32.mrb[0].mxu0
  %v280 = vpop.f32.mrb[0].mxu0
  %v281 = vadd.f32 0.0, %v280
  %v282 = vpop.f32.mrb[0].mxu0
  %283 = vdwg.mxu0
  %v284 = vadd.f32 %v189, %v278
  %v285 = vadd.f32 %v193, %v281
  %v286 = vadd.f32 %v284, %v61
  %v287 = vadd.f32 %v285, %v61
  %v288 = vtanh.pop %v286
  %v289 = vtanh.pop %v287
  %v290 = vpack.c.bf16 %v289, %v288
  %s291 = scalar_lea.vmem %s0, 8
  %v292 = vld [vmem:[%s291] sm:$0xf]
  %v293 = vld [vmem:[%s291 + $0x4] sm:$0xf]
  %v294 = vunpack.c.l.bf16 %v292
  %v295 = vunpack.c.l.bf16 %v293
  %v296 = vadd.f32 %v294, %v187
  %v297 = vadd.f32 %v295, %v191
  %v298 = vtanh.pop %v296
  %v299 = vtanh.pop %v297
  %v300 = vpack.c.bf16 %v299, %v298
  %301 = vmatprep.subr.bf16.mxu0 %v121
  %302 = vmatpush1.bf16.msra.mxu0 %v120
  %303 = vmatprep.subr.bf16.mxu0 %v123
  %304 = vmatpush1.bf16.msra.mxu0 %v122
  %305 = vmatprep.subr.bf16.mxu0 %v125
  %306 = vmatpush1.bf16.msra.mxu0 %v124
  %307 = vmatprep.subr.bf16.mxu0 %v127
  %308 = vmatpush1.bf16.msra.mxu0 %v126
  %309 = vmatprep.subr.bf16.mxu0 %v129
  %310 = vmatpush1.bf16.msra.mxu0 %v128
  %311 = vmatprep.subr.bf16.mxu0 %v131
  %312 = vmatpush1.bf16.msra.mxu0 %v130
  %313 = vmatprep.subr.bf16.mxu0 %v133
  %314 = vmatpush1.bf16.msra.mxu0 %v132
  %315 = vmatprep.subr.bf16.mxu0 %v135
  %316 = vmatpush1.bf16.msra.mxu0 %v134
  %317 = vmatprep.subr.bf16.mxu0 0
  %318 = vmatpush1.bf16.msra.mxu0 0
  %319 = vmatprep.subr.bf16.mxu0 0
  %320 = vmatpush1.bf16.msra.mxu0 0
  %321 = vmatprep.subr.bf16.mxu0 0
  %322 = vmatpush1.bf16.msra.mxu0 0
  %323 = vmatprep.subr.bf16.mxu0 0
  %324 = vmatpush1.bf16.msra.mxu0 0
  %325 = vmatprep.subr.bf16.mxu0 0
  %326 = vmatpush1.bf16.msra.mxu0 0
  %327 = vmatprep.subr.bf16.mxu0 0
  %328 = vmatpush1.bf16.msra.mxu0 0
  %329 = vmatprep.subr.bf16.mxu0 0
  %330 = vmatpush1.bf16.msra.mxu0 0
  %331 = vmatprep.subr.bf16.mxu0 0
  %332 = vmatpush1.bf16.msra.mxu0 0
  %333 = vmatprep.mubr.bf16.mxu0 0
  %334 = vmatmul.mubr.bf16.gmra.mrb[0].mxu0 %v300
  %v335 = vpop.f32.mrb[0].mxu0
  %v336 = vadd.f32 0.0, %v335
  %v337 = vpop.f32.mrb[0].mxu0
  %v338 = vadd.f32 0.0, %v337
  %v339 = vpop.f32.mrb[0].mxu0
  %v340 = vadd.f32 0.0, %v339
  %v341 = vpop.f32.mrb[0].mxu0
  %v342 = vadd.f32 0.0, %v341
  %343 = vdwg.mxu0
  %344 = vmatprep.subr.bf16.mxu0 0
  %345 = vmatpush1.bf16.msra.mxu0 %v227
  %346 = vmatprep.subr.bf16.mxu0 0
  %347 = vmatpush1.bf16.msra.mxu0 %v228
  %348 = vmatprep.subr.bf16.mxu0 0
  %349 = vmatpush1.bf16.msra.mxu0 %v229
  %350 = vmatprep.subr.bf16.mxu0 0
  %351 = vmatpush1.bf16.msra.mxu0 %v230
  %352 = vmatprep.subr.bf16.mxu0 0
  %353 = vmatpush1.bf16.msra.mxu0 %v231
  %354 = vmatprep.subr.bf16.mxu0 0
  %355 = vmatpush1.bf16.msra.mxu0 %v232
  %356 = vmatprep.subr.bf16.mxu0 0
  %357 = vmatpush1.bf16.msra.mxu0 %v233
  %358 = vmatprep.subr.bf16.mxu0 0
  %359 = vmatpush1.bf16.msra.mxu0 %v234
  %360 = vmatprep.subr.bf16.mxu0 0
  %361 = vmatpush1.bf16.msra.mxu0 0
  %362 = vmatprep.subr.bf16.mxu0 0
  %363 = vmatpush1.bf16.msra.mxu0 0
  %364 = vmatprep.subr.bf16.mxu0 0
  %365 = vmatpush1.bf16.msra.mxu0 0
  %366 = vmatprep.subr.bf16.mxu0 0
  %367 = vmatpush1.bf16.msra.mxu0 0
  %368 = vmatprep.subr.bf16.mxu0 0
  %369 = vmatpush1.bf16.msra.mxu0 0
  %370 = vmatprep.subr.bf16.mxu0 0
  %371 = vmatpush1.bf16.msra.mxu0 0
  %372 = vmatprep.subr.bf16.mxu0 0
  %373 = vmatpush1.bf16.msra.mxu0 0
  %374 = vmatprep.subr.bf16.mxu0 0
  %375 = vmatpush1.bf16.msra.mxu0 0
  %376 = vmatprep.mubr.bf16.mxu0 0
  %377 = vmatmul.mubr.bf16.gmra.mrb[0].mxu0 %v290
  %v378 = vpop.f32.mrb[0].mxu0
  %v379 = vadd.f32 0.0, %v378
  %v380 = vpop.f32.mrb[0].mxu0
  %v381 = vpop.f32.mrb[0].mxu0
  %v382 = vadd.f32 0.0, %v381
  %v383 = vpop.f32.mrb[0].mxu0
  %384 = vdwg.mxu0
  %v385 = vadd.f32 %v338, %v379
  %v386 = vadd.f32 %v342, %v382
  %v387 = vadd.f32 %v385, %v61
  %v388 = vadd.f32 %v386, %v61
  %v389 = vtanh.pop %v387
  %v390 = vtanh.pop %v388
  %v391 = vpack.c.bf16 %v390, %v389
  %s392 = scalar_lea.vmem %s0, 16
  %v393 = vld [vmem:[%s392] sm:$0xf]
  %v394 = vld [vmem:[%s392 + $0x4] sm:$0xf]
  %v395 = vunpack.c.l.bf16 %v393
  %v396 = vunpack.c.l.bf16 %v394
  %v397 = vadd.f32 %v395, %v336
  %v398 = vadd.f32 %v396, %v340
  %v399 = vtanh.pop %v397
  %v400 = vtanh.pop %v398
  %v401 = vpack.c.bf16 %v400, %v399
  %402 = vmatprep.subr.bf16.mxu0 %v121
  %403 = vmatpush1.bf16.msra.mxu0 %v120
  %404 = vmatprep.subr.bf16.mxu0 %v123
  %405 = vmatpush1.bf16.msra.mxu0 %v122
  %406 = vmatprep.subr.bf16.mxu0 %v125
  %407 = vmatpush1.bf16.msra.mxu0 %v124
  %408 = vmatprep.subr.bf16.mxu0 %v127
  %409 = vmatpush1.bf16.msra.mxu0 %v126
  %410 = vmatprep.subr.bf16.mxu0 %v129
  %411 = vmatpush1.bf16.msra.mxu0 %v128
  %412 = vmatprep.subr.bf16.mxu0 %v131
  %413 = vmatpush1.bf16.msra.mxu0 %v130
  %414 = vmatprep.subr.bf16.mxu0 %v133
  %415 = vmatpush1.bf16.msra.mxu0 %v132
  %416 = vmatprep.subr.bf16.mxu0 %v135
  %417 = vmatpush1.bf16.msra.mxu0 %v134
  %418 = vmatprep.subr.bf16.mxu0 0
  %419 = vmatpush1.bf16.msra.mxu0 0
  %420 = vmatprep.subr.bf16.mxu0 0
  %421 = vmatpush1.bf16.msra.mxu0 0
  %422 = vmatprep.subr.bf16.mxu0 0
  %423 = vmatpush1.bf16.msra.mxu0 0
  %424 = vmatprep.subr.bf16.mxu0 0
  %425 = vmatpush1.bf16.msra.mxu0 0
  %426 = vmatprep.subr.bf16.mxu0 0
  %427 = vmatpush1.bf16.msra.mxu0 0
  %428 = vmatprep.subr.bf16.mxu0 0
  %429 = vmatpush1.bf16.msra.mxu0 0
  %430 = vmatprep.subr.bf16.mxu0 0
  %431 = vmatpush1.bf16.msra.mxu0 0
  %432 = vmatprep.subr.bf16.mxu0 0
  %433 = vmatpush1.bf16.msra.mxu0 0
  %434 = vmatprep.mubr.bf16.mxu0 0
  %435 = vmatmul.mubr.bf16.gmra.mrb[0].mxu0 %v401
  %v436 = vpop.f32.mrb[0].mxu0
  %v437 = vadd.f32 0.0, %v436
  %v438 = vpop.f32.mrb[0].mxu0
  %v439 = vadd.f32 0.0, %v438
  %v440 = vpop.f32.mrb[0].mxu0
  %v441 = vadd.f32 0.0, %v440
  %v442 = vpop.f32.mrb[0].mxu0
  %v443 = vadd.f32 0.0, %v442
  %444 = vdwg.mxu0
  %445 = vmatprep.subr.bf16.mxu0 0
  %446 = vmatpush1.bf16.msra.mxu0 %v227
  %447 = vmatprep.subr.bf16.mxu0 0
  %448 = vmatpush1.bf16.msra.mxu0 %v228
  %449 = vmatprep.subr.bf16.mxu0 0
  %450 = vmatpush1.bf16.msra.mxu0 %v229
  %451 = vmatprep.subr.bf16.mxu0 0
  %452 = vmatpush1.bf16.msra.mxu0 %v230
  %453 = vmatprep.subr.bf16.mxu0 0
  %454 = vmatpush1.bf16.msra.mxu0 %v231
  %455 = vmatprep.subr.bf16.mxu0 0
  %456 = vmatpush1.bf16.msra.mxu0 %v232
  %457 = vmatprep.subr.bf16.mxu0 0
  %458 = vmatpush1.bf16.msra.mxu0 %v233
  %459 = vmatprep.subr.bf16.mxu0 0
  %460 = vmatpush1.bf16.msra.mxu0 %v234
  %461 = vmatprep.subr.bf16.mxu0 0
  %462 = vmatpush1.bf16.msra.mxu0 0
  %463 = vmatprep.subr.bf16.mxu0 0
  %464 = vmatpush1.bf16.msra.mxu0 0
  %465 = vmatprep.subr.bf16.mxu0 0
  %466 = vmatpush1.bf16.msra.mxu0 0
  %467 = vmatprep.subr.bf16.mxu0 0
  %468 = vmatpush1.bf16.msra.mxu0 0
  %469 = vmatprep.subr.bf16.mxu0 0
  %470 = vmatpush1.bf16.msra.mxu0 0
  %471 = vmatprep.subr.bf16.mxu0 0
  %472 = vmatpush1.bf16.msra.mxu0 0
  %473 = vmatprep.subr.bf16.mxu0 0
  %474 = vmatpush1.bf16.msra.mxu0 0
  %475 = vmatprep.subr.bf16.mxu0 0
  %476 = vmatpush1.bf16.msra.mxu0 0
  %477 = vmatprep.mubr.bf16.mxu0 0
  %478 = vmatmul.mubr.bf16.gmra.mrb[0].mxu0 %v391
  %v479 = vpop.f32.mrb[0].mxu0
  %v480 = vadd.f32 0.0, %v479
  %v481 = vpop.f32.mrb[0].mxu0
  %v482 = vpop.f32.mrb[0].mxu0
  %v483 = vadd.f32 0.0, %v482
  %v484 = vpop.f32.mrb[0].mxu0
  %485 = vdwg.mxu0
  %v486 = vadd.f32 %v439, %v480
  %v487 = vadd.f32 %v443, %v483
  %v488 = vadd.f32 %v486, %v61
  %v489 = vadd.f32 %v487, %v61
  %v490 = vtanh.pop %v488
  %v491 = vtanh.pop %v489
  %v492 = vpack.c.bf16 %v491, %v490
  %s493 = scalar_lea.vmem %s0, 24
  %v494 = vld [vmem:[%s493] sm:$0xf]
  %v495 = vld [vmem:[%s493 + $0x4] sm:$0xf]
  %v496 = vunpack.c.l.bf16 %v494
  %v497 = vunpack.c.l.bf16 %v495
  %v498 = vadd.f32 %v496, %v437
  %v499 = vadd.f32 %v497, %v441
  %v500 = vtanh.pop %v498
  %v501 = vtanh.pop %v499
  %v502 = vpack.c.bf16 %v501, %v500
  %503 = vmatprep.subr.bf16.mxu0 %v121
  %504 = vmatpush1.bf16.msra.mxu0 %v120
  %505 = vmatprep.subr.bf16.mxu0 %v123
  %506 = vmatpush1.bf16.msra.mxu0 %v122
  %507 = vmatprep.subr.bf16.mxu0 %v125
  %508 = vmatpush1.bf16.msra.mxu0 %v124
  %509 = vmatprep.subr.bf16.mxu0 %v127
  %510 = vmatpush1.bf16.msra.mxu0 %v126
  %511 = vmatprep.subr.bf16.mxu0 %v129
  %512 = vmatpush1.bf16.msra.mxu0 %v128
  %513 = vmatprep.subr.bf16.mxu0 %v131
  %514 = vmatpush1.bf16.msra.mxu0 %v130
  %515 = vmatprep.subr.bf16.mxu0 %v133
  %516 = vmatpush1.bf16.msra.mxu0 %v132
  %517 = vmatprep.subr.bf16.mxu0 %v135
  %518 = vmatpush1.bf16.msra.mxu0 %v134
  %519 = vmatprep.subr.bf16.mxu0 0
  %520 = vmatpush1.bf16.msra.mxu0 0
  %521 = vmatprep.subr.bf16.mxu0 0
  %522 = vmatpush1.bf16.msra.mxu0 0
  %523 = vmatprep.subr.bf16.mxu0 0
  %524 = vmatpush1.bf16.msra.mxu0 0
  %525 = vmatprep.subr.bf16.mxu0 0
  %526 = vmatpush1.bf16.msra.mxu0 0
  %527 = vmatprep.subr.bf16.mxu0 0
  %528 = vmatpush1.bf16.msra.mxu0 0
  %529 = vmatprep.subr.bf16.mxu0 0
  %530 = vmatpush1.bf16.msra.mxu0 0
  %531 = vmatprep.subr.bf16.mxu0 0
  %532 = vmatpush1.bf16.msra.mxu0 0
  %533 = vmatprep.subr.bf16.mxu0 0
  %534 = vmatpush1.bf16.msra.mxu0 0
  %535 = vmatprep.mubr.bf16.mxu0 0
  %536 = vmatmul.mubr.bf16.gmra.mrb[0].mxu0 %v502
  %v537 = vpop.f32.mrb[0].mxu0
  %v538 = vadd.f32 0.0, %v537
  %v539 = vpop.f32.mrb[0].mxu0
  %v540 = vadd.f32 0.0, %v539
  %v541 = vpop.f32.mrb[0].mxu0
  %v542 = vadd.f32 0.0, %v541
  %v543 = vpop.f32.mrb[0].mxu0
  %v544 = vadd.f32 0.0, %v543
  %545 = vdwg.mxu0
  %546 = vmatprep.subr.bf16.mxu0 0
  %547 = vmatpush1.bf16.msra.mxu0 %v227
  %548 = vmatprep.subr.bf16.mxu0 0
  %549 = vmatpush1.bf16.msra.mxu0 %v228
  %550 = vmatprep.subr.bf16.mxu0 0
  %551 = vmatpush1.bf16.msra.mxu0 %v229
  %552 = vmatprep.subr.bf16.mxu0 0
  %553 = vmatpush1.bf16.msra.mxu0 %v230
  %554 = vmatprep.subr.bf16.mxu0 0
  %555 = vmatpush1.bf16.msra.mxu0 %v231
  %556 = vmatprep.subr.bf16.mxu0 0
  %557 = vmatpush1.bf16.msra.mxu0 %v232
  %558 = vmatprep.subr.bf16.mxu0 0
  %559 = vmatpush1.bf16.msra.mxu0 %v233
  %560 = vmatprep.subr.bf16.mxu0 0
  %561 = vmatpush1.bf16.msra.mxu0 %v234
  %562 = vmatprep.subr.bf16.mxu0 0
  %563 = vmatpush1.bf16.msra.mxu0 0
  %564 = vmatprep.subr.bf16.mxu0 0
  %565 = vmatpush1.bf16.msra.mxu0 0
  %566 = vmatprep.subr.bf16.mxu0 0
  %567 = vmatpush1.bf16.msra.mxu0 0
  %568 = vmatprep.subr.bf16.mxu0 0
  %569 = vmatpush1.bf16.msra.mxu0 0
  %570 = vmatprep.subr.bf16.mxu0 0
  %571 = vmatpush1.bf16.msra.mxu0 0
  %572 = vmatprep.subr.bf16.mxu0 0
  %573 = vmatpush1.bf16.msra.mxu0 0
  %574 = vmatprep.subr.bf16.mxu0 0
  %575 = vmatpush1.bf16.msra.mxu0 0
  %576 = vmatprep.subr.bf16.mxu0 0
  %577 = vmatpush1.bf16.msra.mxu0 0
  %578 = vmatprep.mubr.bf16.mxu0 0
  %579 = vmatmul.mubr.bf16.gmra.mrb[0].mxu0 %v492
  %v580 = vpop.f32.mrb[0].mxu0
  %v581 = vadd.f32 0.0, %v580
  %v582 = vpop.f32.mrb[0].mxu0
  %v583 = vpop.f32.mrb[0].mxu0
  %v584 = vadd.f32 0.0, %v583
  %v585 = vpop.f32.mrb[0].mxu0
  %586 = vdwg.mxu0
  %v587 = vadd.f32 %v540, %v581
  %v588 = vadd.f32 %v544, %v584
  %v589 = vadd.f32 %v587, %v61
  %v590 = vadd.f32 %v588, %v61
  %v591 = vtanh.pop %v589
  %v592 = vtanh.pop %v590
  %v593 = vpack.c.bf16 %v592, %v591
  %s594 = scalar_lea.vmem %s0, 32
  %v595 = vld [vmem:[%s594] sm:$0xf]
  %v596 = vld [vmem:[%s594 + $0x4] sm:$0xf]
  %v597 = vunpack.c.l.bf16 %v595
  %v598 = vunpack.c.l.bf16 %v596
  %v599 = vadd.f32 %v597, %v538
  %v600 = vadd.f32 %v598, %v542
  %v601 = vtanh.pop %v599
  %v602 = vtanh.pop %v600
  %v603 = vpack.c.bf16 %v602, %v601
  %604 = vmatprep.subr.bf16.mxu0 %v121
  %605 = vmatpush1.bf16.msra.mxu0 %v120
  %606 = vmatprep.subr.bf16.mxu0 %v123
  %607 = vmatpush1.bf16.msra.mxu0 %v122
  %608 = vmatprep.subr.bf16.mxu0 %v125
  %609 = vmatpush1.bf16.msra.mxu0 %v124
  %610 = vmatprep.subr.bf16.mxu0 %v127
  %611 = vmatpush1.bf16.msra.mxu0 %v126
  %612 = vmatprep.subr.bf16.mxu0 %v129
  %613 = vmatpush1.bf16.msra.mxu0 %v128
  %614 = vmatprep.subr.bf16.mxu0 %v131
  %615 = vmatpush1.bf16.msra.mxu0 %v130
  %616 = vmatprep.subr.bf16.mxu0 %v133
  %617 = vmatpush1.bf16.msra.mxu0 %v132
  %618 = vmatprep.subr.bf16.mxu0 %v135
  %619 = vmatpush1.bf16.msra.mxu0 %v134
  %620 = vmatprep.subr.bf16.mxu0 0
  %621 = vmatpush1.bf16.msra.mxu0 0
  %622 = vmatprep.subr.bf16.mxu0 0
  %623 = vmatpush1.bf16.msra.mxu0 0
  %624 = vmatprep.subr.bf16.mxu0 0
  %625 = vmatpush1.bf16.msra.mxu0 0
  %626 = vmatprep.subr.bf16.mxu0 0
  %627 = vmatpush1.bf16.msra.mxu0 0
  %628 = vmatprep.subr.bf16.mxu0 0
  %629 = vmatpush1.bf16.msra.mxu0 0
  %630 = vmatprep.subr.bf16.mxu0 0
  %631 = vmatpush1.bf16.msra.mxu0 0
  %632 = vmatprep.subr.bf16.mxu0 0
  %633 = vmatpush1.bf16.msra.mxu0 0
  %634 = vmatprep.subr.bf16.mxu0 0
  %635 = vmatpush1.bf16.msra.mxu0 0
  %636 = vmatprep.mubr.bf16.mxu0 0
  %637 = vmatmul.mubr.bf16.gmra.mrb[0].mxu0 %v603
  %v638 = vpop.f32.mrb[0].mxu0
  %v639 = vadd.f32 0.0, %v638
  %v640 = vpop.f32.mrb[0].mxu0
  %v641 = vadd.f32 0.0, %v640
  %v642 = vpop.f32.mrb[0].mxu0
  %v643 = vadd.f32 0.0, %v642
  %v644 = vpop.f32.mrb[0].mxu0
  %v645 = vadd.f32 0.0, %v644
  %646 = vdwg.mxu0
  %647 = vmatprep.subr.bf16.mxu0 0
  %648 = vmatpush1.bf16.msra.mxu0 %v227
  %649 = vmatprep.subr.bf16.mxu0 0
  %650 = vmatpush1.bf16.msra.mxu0 %v228
  %651 = vmatprep.subr.bf16.mxu0 0
  %652 = vmatpush1.bf16.msra.mxu0 %v229
  %653 = vmatprep.subr.bf16.mxu0 0
  %654 = vmatpush1.bf16.msra.mxu0 %v230
  %655 = vmatprep.subr.bf16.mxu0 0
  %656 = vmatpush1.bf16.msra.mxu0 %v231
  %657 = vmatprep.subr.bf16.mxu0 0
  %658 = vmatpush1.bf16.msra.mxu0 %v232
  %659 = vmatprep.subr.bf16.mxu0 0
  %660 = vmatpush1.bf16.msra.mxu0 %v233
  %661 = vmatprep.subr.bf16.mxu0 0
  %662 = vmatpush1.bf16.msra.mxu0 %v234
  %663 = vmatprep.subr.bf16.mxu0 0
  %664 = vmatpush1.bf16.msra.mxu0 0
  %665 = vmatprep.subr.bf16.mxu0 0
  %666 = vmatpush1.bf16.msra.mxu0 0
  %667 = vmatprep.subr.bf16.mxu0 0
  %668 = vmatpush1.bf16.msra.mxu0 0
  %669 = vmatprep.subr.bf16.mxu0 0
  %670 = vmatpush1.bf16.msra.mxu0 0
  %671 = vmatprep.subr.bf16.mxu0 0
  %672 = vmatpush1.bf16.msra.mxu0 0
  %673 = vmatprep.subr.bf16.mxu0 0
  %674 = vmatpush1.bf16.msra.mxu0 0
  %675 = vmatprep.subr.bf16.mxu0 0
  %676 = vmatpush1.bf16.msra.mxu0 0
  %677 = vmatprep.subr.bf16.mxu0 0
  %678 = vmatpush1.bf16.msra.mxu0 0
  %679 = vmatprep.mubr.bf16.mxu0 0
  %680 = vmatmul.mubr.bf16.gmra.mrb[0].mxu0 %v593
  %v681 = vpop.f32.mrb[0].mxu0
  %v682 = vadd.f32 0.0, %v681
  %v683 = vpop.f32.mrb[0].mxu0
  %v684 = vpop.f32.mrb[0].mxu0
  %v685 = vadd.f32 0.0, %v684
  %v686 = vpop.f32.mrb[0].mxu0
  %687 = vdwg.mxu0
  %v688 = vadd.f32 %v641, %v682
  %v689 = vadd.f32 %v645, %v685
  %v690 = vadd.f32 %v688, %v61
  %v691 = vadd.f32 %v689, %v61
  %v692 = vtanh.pop %v690
  %v693 = vtanh.pop %v691
  %v694 = vpack.c.bf16 %v693, %v692
  %s695 = scalar_lea.vmem %s0, 40
  %v696 = vld [vmem:[%s695] sm:$0xf]
  %v697 = vld [vmem:[%s695 + $0x4] sm:$0xf]
  %v698 = vunpack.c.l.bf16 %v696
  %v699 = vunpack.c.l.bf16 %v697
  %v700 = vadd.f32 %v698, %v639
  %v701 = vadd.f32 %v699, %v643
  %v702 = vtanh.pop %v700
  %v703 = vtanh.pop %v701
  %v704 = vpack.c.bf16 %v703, %v702
  %705 = vmatprep.subr.bf16.mxu0 %v121
  %706 = vmatpush1.bf16.msra.mxu0 %v120
  %707 = vmatprep.subr.bf16.mxu0 %v123
  %708 = vmatpush1.bf16.msra.mxu0 %v122
  %709 = vmatprep.subr.bf16.mxu0 %v125
  %710 = vmatpush1.bf16.msra.mxu0 %v124
  %711 = vmatprep.subr.bf16.mxu0 %v127
  %712 = vmatpush1.bf16.msra.mxu0 %v126
  %713 = vmatprep.subr.bf16.mxu0 %v129
  %714 = vmatpush1.bf16.msra.mxu0 %v128
  %715 = vmatprep.subr.bf16.mxu0 %v131
  %716 = vmatpush1.bf16.msra.mxu0 %v130
  %717 = vmatprep.subr.bf16.mxu0 %v133
  %718 = vmatpush1.bf16.msra.mxu0 %v132
  %719 = vmatprep.subr.bf16.mxu0 %v135
  %720 = vmatpush1.bf16.msra.mxu0 %v134
  %721 = vmatprep.subr.bf16.mxu0 0
  %722 = vmatpush1.bf16.msra.mxu0 0
  %723 = vmatprep.subr.bf16.mxu0 0
  %724 = vmatpush1.bf16.msra.mxu0 0
  %725 = vmatprep.subr.bf16.mxu0 0
  %726 = vmatpush1.bf16.msra.mxu0 0
  %727 = vmatprep.subr.bf16.mxu0 0
  %728 = vmatpush1.bf16.msra.mxu0 0
  %729 = vmatprep.subr.bf16.mxu0 0
  %730 = vmatpush1.bf16.msra.mxu0 0
  %731 = vmatprep.subr.bf16.mxu0 0
  %732 = vmatpush1.bf16.msra.mxu0 0
  %733 = vmatprep.subr.bf16.mxu0 0
  %734 = vmatpush1.bf16.msra.mxu0 0
  %735 = vmatprep.subr.bf16.mxu0 0
  %736 = vmatpush1.bf16.msra.mxu0 0
  %737 = vmatprep.mubr.bf16.mxu0 0
  %738 = vmatmul.mubr.bf16.gmra.mrb[0].mxu0 %v704
  %v739 = vpop.f32.mrb[0].mxu0
  %v740 = vadd.f32 0.0, %v739
  %v741 = vpop.f32.mrb[0].mxu0
  %v742 = vadd.f32 0.0, %v741
  %v743 = vpop.f32.mrb[0].mxu0
  %v744 = vadd.f32 0.0, %v743
  %v745 = vpop.f32.mrb[0].mxu0
  %v746 = vadd.f32 0.0, %v745
  %747 = vdwg.mxu0
  %748 = vmatprep.subr.bf16.mxu0 0
  %749 = vmatpush1.bf16.msra.mxu0 %v227
  %750 = vmatprep.subr.bf16.mxu0 0
  %751 = vmatpush1.bf16.msra.mxu0 %v228
  %752 = vmatprep.subr.bf16.mxu0 0
  %753 = vmatpush1.bf16.msra.mxu0 %v229
  %754 = vmatprep.subr.bf16.mxu0 0
  %755 = vmatpush1.bf16.msra.mxu0 %v230
  %756 = vmatprep.subr.bf16.mxu0 0
  %757 = vmatpush1.bf16.msra.mxu0 %v231
  %758 = vmatprep.subr.bf16.mxu0 0
  %759 = vmatpush1.bf16.msra.mxu0 %v232
  %760 = vmatprep.subr.bf16.mxu0 0
  %761 = vmatpush1.bf16.msra.mxu0 %v233
  %762 = vmatprep.subr.bf16.mxu0 0
  %763 = vmatpush1.bf16.msra.mxu0 %v234
  %764 = vmatprep.subr.bf16.mxu0 0
  %765 = vmatpush1.bf16.msra.mxu0 0
  %766 = vmatprep.subr.bf16.mxu0 0
  %767 = vmatpush1.bf16.msra.mxu0 0
  %768 = vmatprep.subr.bf16.mxu0 0
  %769 = vmatpush1.bf16.msra.mxu0 0
  %770 = vmatprep.subr.bf16.mxu0 0
  %771 = vmatpush1.bf16.msra.mxu0 0
  %772 = vmatprep.subr.bf16.mxu0 0
  %773 = vmatpush1.bf16.msra.mxu0 0
  %774 = vmatprep.subr.bf16.mxu0 0
  %775 = vmatpush1.bf16.msra.mxu0 0
  %776 = vmatprep.subr.bf16.mxu0 0
  %777 = vmatpush1.bf16.msra.mxu0 0
  %778 = vmatprep.subr.bf16.mxu0 0
  %779 = vmatpush1.bf16.msra.mxu0 0
  %780 = vmatprep.mubr.bf16.mxu0 0
  %781 = vmatmul.mubr.bf16.gmra.mrb[0].mxu0 %v694
  %v782 = vpop.f32.mrb[0].mxu0
  %v783 = vadd.f32 0.0, %v782
  %v784 = vpop.f32.mrb[0].mxu0
  %v785 = vpop.f32.mrb[0].mxu0
  %v786 = vadd.f32 0.0, %v785
  %v787 = vpop.f32.mrb[0].mxu0
  %788 = vdwg.mxu0
  %v789 = vadd.f32 %v742, %v783
  %v790 = vadd.f32 %v746, %v786
  %v791 = vadd.f32 %v789, %v61
  %v792 = vadd.f32 %v790, %v61
  %v793 = vtanh.pop %v791
  %v794 = vtanh.pop %v792
  %v795 = vpack.c.bf16 %v794, %v793
  %s796 = scalar_lea.vmem %s0, 48
  %v797 = vld [vmem:[%s796] sm:$0xf]
  %v798 = vld [vmem:[%s796 + $0x4] sm:$0xf]
  %v799 = vunpack.c.l.bf16 %v797
  %v800 = vunpack.c.l.bf16 %v798
  %v801 = vadd.f32 %v799, %v740
  %v802 = vadd.f32 %v800, %v744
  %v803 = vtanh.pop %v801
  %v804 = vtanh.pop %v802
  %v805 = vpack.c.bf16 %v804, %v803
  %806 = vmatprep.subr.bf16.mxu0 %v121
  %807 = vmatpush1.bf16.msra.mxu0 %v120
  %808 = vmatprep.subr.bf16.mxu0 %v123
  %809 = vmatpush1.bf16.msra.mxu0 %v122
  %810 = vmatprep.subr.bf16.mxu0 %v125
  %811 = vmatpush1.bf16.msra.mxu0 %v124
  %812 = vmatprep.subr.bf16.mxu0 %v127
  %813 = vmatpush1.bf16.msra.mxu0 %v126
  %814 = vmatprep.subr.bf16.mxu0 %v129
  %815 = vmatpush1.bf16.msra.mxu0 %v128
  %816 = vmatprep.subr.bf16.mxu0 %v131
  %817 = vmatpush1.bf16.msra.mxu0 %v130
  %818 = vmatprep.subr.bf16.mxu0 %v133
  %819 = vmatpush1.bf16.msra.mxu0 %v132
  %820 = vmatprep.subr.bf16.mxu0 %v135
  %821 = vmatpush1.bf16.msra.mxu0 %v134
  %822 = vmatprep.subr.bf16.mxu0 0
  %823 = vmatpush1.bf16.msra.mxu0 0
  %824 = vmatprep.subr.bf16.mxu0 0
  %825 = vmatpush1.bf16.msra.mxu0 0
  %826 = vmatprep.subr.bf16.mxu0 0
  %827 = vmatpush1.bf16.msra.mxu0 0
  %828 = vmatprep.subr.bf16.mxu0 0
  %829 = vmatpush1.bf16.msra.mxu0 0
  %830 = vmatprep.subr.bf16.mxu0 0
  %831 = vmatpush1.bf16.msra.mxu0 0
  %832 = vmatprep.subr.bf16.mxu0 0
  %833 = vmatpush1.bf16.msra.mxu0 0
  %834 = vmatprep.subr.bf16.mxu0 0
  %835 = vmatpush1.bf16.msra.mxu0 0
  %836 = vmatprep.subr.bf16.mxu0 0
  %837 = vmatpush1.bf16.msra.mxu0 0
  %838 = vmatprep.mubr.bf16.mxu0 0
  %839 = vmatmul.mubr.bf16.gmra.mrb[0].mxu0 %v805
  %v840 = vpop.f32.mrb[0].mxu0
  %v841 = vadd.f32 0.0, %v840
  %v842 = vpop.f32.mrb[0].mxu0
  %v843 = vadd.f32 0.0, %v842
  %v844 = vpop.f32.mrb[0].mxu0
  %v845 = vadd.f32 0.0, %v844
  %v846 = vpop.f32.mrb[0].mxu0
  %v847 = vadd.f32 0.0, %v846
  %848 = vdwg.mxu0
  %849 = vmatprep.subr.bf16.mxu0 0
  %850 = vmatpush1.bf16.msra.mxu0 %v227
  %851 = vmatprep.subr.bf16.mxu0 0
  %852 = vmatpush1.bf16.msra.mxu0 %v228
  %853 = vmatprep.subr.bf16.mxu0 0
  %854 = vmatpush1.bf16.msra.mxu0 %v229
  %855 = vmatprep.subr.bf16.mxu0 0
  %856 = vmatpush1.bf16.msra.mxu0 %v230
  %857 = vmatprep.subr.bf16.mxu0 0
  %858 = vmatpush1.bf16.msra.mxu0 %v231
  %859 = vmatprep.subr.bf16.mxu0 0
  %860 = vmatpush1.bf16.msra.mxu0 %v232
  %861 = vmatprep.subr.bf16.mxu0 0
  %862 = vmatpush1.bf16.msra.mxu0 %v233
  %863 = vmatprep.subr.bf16.mxu0 0
  %864 = vmatpush1.bf16.msra.mxu0 %v234
  %865 = vmatprep.subr.bf16.mxu0 0
  %866 = vmatpush1.bf16.msra.mxu0 0
  %867 = vmatprep.subr.bf16.mxu0 0
  %868 = vmatpush1.bf16.msra.mxu0 0
  %869 = vmatprep.subr.bf16.mxu0 0
  %870 = vmatpush1.bf16.msra.mxu0 0
  %871 = vmatprep.subr.bf16.mxu0 0
  %872 = vmatpush1.bf16.msra.mxu0 0
  %873 = vmatprep.subr.bf16.mxu0 0
  %874 = vmatpush1.bf16.msra.mxu0 0
  %875 = vmatprep.subr.bf16.mxu0 0
  %876 = vmatpush1.bf16.msra.mxu0 0
  %877 = vmatprep.subr.bf16.mxu0 0
  %878 = vmatpush1.bf16.msra.mxu0 0
  %879 = vmatprep.subr.bf16.mxu0 0
  %880 = vmatpush1.bf16.msra.mxu0 0
  %881 = vmatprep.mubr.bf16.mxu0 0
  %882 = vmatmul.mubr.bf16.gmra.mrb[0].mxu0 %v795
  %v883 = vpop.f32.mrb[0].mxu0
  %v884 = vadd.f32 0.0, %v883
  %v885 = vpop.f32.mrb[0].mxu0
  %v886 = vpop.f32.mrb[0].mxu0
  %v887 = vadd.f32 0.0, %v886
  %v888 = vpop.f32.mrb[0].mxu0
  %889 = vdwg.mxu0
  %v890 = vadd.f32 %v843, %v884
  %v891 = vadd.f32 %v847, %v887
  %v892 = vadd.f32 %v890, %v61
  %v893 = vadd.f32 %v891, %v61
  %v894 = vtanh.pop %v892
  %v895 = vtanh.pop %v893
  %v896 = vpack.c.bf16 %v895, %v894
  %s897 = scalar_lea.vmem %s0, 56
  %v898 = vld [vmem:[%s897] sm:$0xf]
  %v899 = vld [vmem:[%s897 + $0x4] sm:$0xf]
  %v900 = vunpack.c.l.bf16 %v898
  %v901 = vunpack.c.l.bf16 %v899
  %v902 = vadd.f32 %v900, %v841
  %v903 = vadd.f32 %v901, %v845
  %v904 = vtanh.pop %v902
  %v905 = vtanh.pop %v903
  %v906 = vpack.c.bf16 %v905, %v904
  %907 = vmatprep.subr.bf16.mxu0 %v121
  %908 = vmatpush1.bf16.msra.mxu0 %v120
  %909 = vmatprep.subr.bf16.mxu0 %v123
  %910 = vmatpush1.bf16.msra.mxu0 %v122
  %911 = vmatprep.subr.bf16.mxu0 %v125
  %912 = vmatpush1.bf16.msra.mxu0 %v124
  %913 = vmatprep.subr.bf16.mxu0 %v127
  %914 = vmatpush1.bf16.msra.mxu0 %v126
  %915 = vmatprep.subr.bf16.mxu0 %v129
  %916 = vmatpush1.bf16.msra.mxu0 %v128
  %917 = vmatprep.subr.bf16.mxu0 %v131
  %918 = vmatpush1.bf16.msra.mxu0 %v130
  %919 = vmatprep.subr.bf16.mxu0 %v133
  %920 = vmatpush1.bf16.msra.mxu0 %v132
  %921 = vmatprep.subr.bf16.mxu0 %v135
  %922 = vmatpush1.bf16.msra.mxu0 %v134
  %923 = vmatprep.subr.bf16.mxu0 0
  %924 = vmatpush1.bf16.msra.mxu0 0
  %925 = vmatprep.subr.bf16.mxu0 0
  %926 = vmatpush1.bf16.msra.mxu0 0
  %927 = vmatprep.subr.bf16.mxu0 0
  %928 = vmatpush1.bf16.msra.mxu0 0
  %929 = vmatprep.subr.bf16.mxu0 0
  %930 = vmatpush1.bf16.msra.mxu0 0
  %931 = vmatprep.subr.bf16.mxu0 0
  %932 = vmatpush1.bf16.msra.mxu0 0
  %933 = vmatprep.subr.bf16.mxu0 0
  %934 = vmatpush1.bf16.msra.mxu0 0
  %935 = vmatprep.subr.bf16.mxu0 0
  %936 = vmatpush1.bf16.msra.mxu0 0
  %937 = vmatprep.subr.bf16.mxu0 0
  %938 = vmatpush1.bf16.msra.mxu0 0
  %939 = vmatprep.mubr.bf16.mxu0 0
  %940 = vmatmul.mubr.bf16.gmra.mrb[0].mxu0 %v906
  %v941 = vpop.f32.mrb[0].mxu0
  %v942 = vpop.f32.mrb[0].mxu0
  %v943 = vadd.f32 0.0, %v942
  %v944 = vpop.f32.mrb[0].mxu0
  %v945 = vpop.f32.mrb[0].mxu0
  %v946 = vadd.f32 0.0, %v945
  %947 = vdwg.mxu0
  %948 = vmatprep.subr.bf16.mxu0 0
  %949 = vmatpush1.bf16.msra.mxu0 %v227
  %950 = vmatprep.subr.bf16.mxu0 0
  %951 = vmatpush1.bf16.msra.mxu0 %v228
  %952 = vmatprep.subr.bf16.mxu0 0
  %953 = vmatpush1.bf16.msra.mxu0 %v229
  %954 = vmatprep.subr.bf16.mxu0 0
  %955 = vmatpush1.bf16.msra.mxu0 %v230
  %956 = vmatprep.subr.bf16.mxu0 0
  %957 = vmatpush1.bf16.msra.mxu0 %v231
  %958 = vmatprep.subr.bf16.mxu0 0
  %959 = vmatpush1.bf16.msra.mxu0 %v232
  %960 = vmatprep.subr.bf16.mxu0 0
  %961 = vmatpush1.bf16.msra.mxu0 %v233
  %962 = vmatprep.subr.bf16.mxu0 0
  %963 = vmatpush1.bf16.msra.mxu0 %v234
  %964 = vmatprep.subr.bf16.mxu0 0
  %965 = vmatpush1.bf16.msra.mxu0 0
  %966 = vmatprep.subr.bf16.mxu0 0
  %967 = vmatpush1.bf16.msra.mxu0 0
  %968 = vmatprep.subr.bf16.mxu0 0
  %969 = vmatpush1.bf16.msra.mxu0 0
  %970 = vmatprep.subr.bf16.mxu0 0
  %971 = vmatpush1.bf16.msra.mxu0 0
  %972 = vmatprep.subr.bf16.mxu0 0
  %973 = vmatpush1.bf16.msra.mxu0 0
  %974 = vmatprep.subr.bf16.mxu0 0
  %975 = vmatpush1.bf16.msra.mxu0 0
  %976 = vmatprep.subr.bf16.mxu0 0
  %977 = vmatpush1.bf16.msra.mxu0 0
  %978 = vmatprep.subr.bf16.mxu0 0
  %979 = vmatpush1.bf16.msra.mxu0 0
  %980 = vmatprep.mubr.bf16.mxu0 0
  %981 = vmatmul.mubr.bf16.gmra.mrb[0].mxu0 %v896
  %v982 = vpop.f32.mrb[0].mxu0
  %v983 = vadd.f32 0.0, %v982
  %v984 = vpop.f32.mrb[0].mxu0
  %v985 = vpop.f32.mrb[0].mxu0
  %v986 = vadd.f32 0.0, %v985
  %v987 = vpop.f32.mrb[0].mxu0
  %988 = vdwg.mxu0
  %v989 = vadd.f32 %v943, %v983
  %v990 = vadd.f32 %v946, %v986
  %v991 = vadd.f32 %v989, %v61
  %v992 = vadd.f32 %v990, %v61
  %v993 = vtanh.pop %v991
  %v994 = vtanh.pop %v992
  %v995 = vpack.c.bf16 %v994, %v993
  %v996 = vld [vmem:[%s4] sm:$0xf]
  %v997 = vld [vmem:[%s4 + $0x4] sm:$0xf]
  %v998 = vld [vmem:[%s4 + $0x8] sm:$0xf]
  %v999 = vld [vmem:[%s4 + $0xc] sm:$0xf]
  %v1000 = vld [vmem:[%s4 + $0x10] sm:$0xf]
  %v1001 = vld [vmem:[%s4 + $0x14] sm:$0xf]
  %v1002 = vld [vmem:[%s4 + $0x18] sm:$0xf]
  %v1003 = vld [vmem:[%s4 + $0x1c] sm:$0xf]
  %v1004 = vld [vmem:[%s4 + $0x20] sm:$0xf]
  %v1005 = vld [vmem:[%s4 + $0x24] sm:$0xf]
  %v1006 = vld [vmem:[%s4 + $0x28] sm:$0xf]
  %v1007 = vld [vmem:[%s4 + $0x2c] sm:$0xf]
  %v1008 = vld [vmem:[%s4 + $0x30] sm:$0xf]
  %v1009 = vld [vmem:[%s4 + $0x34] sm:$0xf]
  %v1010 = vld [vmem:[%s4 + $0x38] sm:$0xf]
  %v1011 = vld [vmem:[%s4 + $0x3c] sm:$0xf]
  %v1012 = vld [vmem:[%s5] sm:$0x1]
  %v1014 = vlaneseq
  %v1015 = vshrl.u32 %v1014, 7
  %v1016 = vsub.s32 0, %v1015
  %v1017 = vrot.slane %v1012, %v1016
  %v1035 = vunpack.c.l.b16 %v996
  %v1036 = vunpack.c.l.b16 %v997
  %v1037 = vunpack.c.l.b16 %v998
  %v1038 = vunpack.c.l.b16 %v999
  %v1039 = vunpack.c.l.b16 %v1000
  %v1040 = vunpack.c.l.b16 %v1001
  %v1041 = vunpack.c.l.b16 %v1002
  %v1042 = vunpack.c.l.b16 %v1003
  %v1043 = vunpack.c.l.b16 %v1004
  %v1044 = vunpack.c.l.b16 %v1005
  %v1045 = vunpack.c.l.b16 %v1006
  %v1046 = vunpack.c.l.b16 %v1007
  %v1047 = vunpack.c.l.b16 %v1008
  %v1048 = vunpack.c.l.b16 %v1009
  %v1049 = vunpack.c.l.b16 %v1010
  %v1050 = vunpack.c.l.b16 %v1011
  %v1051 = vpack.c.b16 %v1036, %v1035
  %v1052 = vpack.c.b16 %v1038, %v1037
  %v1053 = vpack.c.b16 %v1040, %v1039
  %v1054 = vpack.c.b16 %v1042, %v1041
  %v1055 = vpack.c.b16 %v1044, %v1043
  %v1056 = vpack.c.b16 %v1046, %v1045
  %v1057 = vpack.c.b16 %v1048, %v1047
  %v1058 = vpack.c.b16 %v1050, %v1049
  %1067 = vmatprep.subr.bf16.mxu0 0
  %1068 = vmatpush1.bf16.msra.mxu0 %v1051
  %1069 = vmatprep.subr.bf16.mxu0 0
  %1070 = vmatpush1.bf16.msra.mxu0 %v1052
  %1071 = vmatprep.subr.bf16.mxu0 0
  %1072 = vmatpush1.bf16.msra.mxu0 %v1053
  %1073 = vmatprep.subr.bf16.mxu0 0
  %1074 = vmatpush1.bf16.msra.mxu0 %v1054
  %1075 = vmatprep.subr.bf16.mxu0 0
  %1076 = vmatpush1.bf16.msra.mxu0 %v1055
  %1077 = vmatprep.subr.bf16.mxu0 0
  %1078 = vmatpush1.bf16.msra.mxu0 %v1056
  %1079 = vmatprep.subr.bf16.mxu0 0
  %1080 = vmatpush1.bf16.msra.mxu0 %v1057
  %1081 = vmatprep.subr.bf16.mxu0 0
  %1082 = vmatpush1.bf16.msra.mxu0 %v1058
  %1083 = vmatprep.subr.bf16.mxu0 0
  %1084 = vmatpush1.bf16.msra.mxu0 0
  %1085 = vmatprep.subr.bf16.mxu0 0
  %1086 = vmatpush1.bf16.msra.mxu0 0
  %1087 = vmatprep.subr.bf16.mxu0 0
  %1088 = vmatpush1.bf16.msra.mxu0 0
  %1089 = vmatprep.subr.bf16.mxu0 0
  %1090 = vmatpush1.bf16.msra.mxu0 0
  %1091 = vmatprep.subr.bf16.mxu0 0
  %1092 = vmatpush1.bf16.msra.mxu0 0
  %1093 = vmatprep.subr.bf16.mxu0 0
  %1094 = vmatpush1.bf16.msra.mxu0 0
  %1095 = vmatprep.subr.bf16.mxu0 0
  %1096 = vmatpush1.bf16.msra.mxu0 0
  %1097 = vmatprep.subr.bf16.mxu0 0
  %1098 = vmatpush1.bf16.msra.mxu0 0
  %1099 = vmatprep.mubr.bf16.mxu0 0
  %1100 = vmatmul.mubr.bf16.gmra.mrb[0].mxu0 %v995
  %v1101 = vpop.f32.mrb[0].mxu0
  %v1102 = vadd.f32 %v1017, %v1101
  %v1103 = vpop.f32.mrb[0].mxu0
  %v1104 = vpop.f32.mrb[0].mxu0
  %v1105 = vadd.f32 %v1017, %v1104
  %v1106 = vpop.f32.mrb[0].mxu0
  %1107 = vdwg.mxu0
  %1108 = vst [vmem:[%s6] sm:$0xff] %v1102
  %1109 = vst [vmem:[%s6 + $0x8] sm:$0xff] %v1105
  // Predicated region
  $region26: #{rnn_text_classifier_forward.1} parent=0 // pred_check
    _
  $region27: #{rnn_text_classifier_forward.1} parent=0 // pred_check_branch
    %1111 = sbr.rel (0) target = $region29
  $region28: #{rnn_text_classifier_forward.1} parent=0 // pred_region
    _
  $region29: #{rnn_text_classifier_forward.1} parent=0 // pred_fallthru
    _
  // Predicated region
  $region30: #{rnn_text_classifier_forward.1} parent=0 // pred_check
    _
  $region31: #{rnn_text_classifier_forward.1} parent=0 // pred_check_branch
    %1113 = sbr.rel (0) target = $region33
  $region32: #{rnn_text_classifier_forward.1} parent=0 // pred_region
    _
  $region33: #{rnn_text_classifier_forward.1} parent=0 // pred_fallthru
    _

</llo_original>
